<compile_context>
chip_gen: v6e
topology: v6e:2x2x1
jax: 0.10.0
libtpu: 0.0.40
codegen_flags: <defaults>
</compile_context>

<pallas_src>
import functools

import jax
import jax.numpy as jnp
from jax.experimental import pallas as pl
from jax.experimental.pallas import tpu as pltpu

LANE = 128


def _pad_to_lane(n):
    return max(LANE, ((n + LANE - 1) // LANE) * LANE)


def _pick_tile_h(H, W, C, c_out_p, budget_bytes=8 * 1024 * 1024):
    """Largest divisor of H whose per-tile VMEM footprint fits the budget."""
    per_row = (3 * 2 * (W + 2) * C * 2        # 3 halo views, double-buffered, bf16
               + W * (9 * C + 1) * 2          # patch matrix (bf16)
               + W * c_out_p * 4)             # conv activations (f32)
    max_rows = max(1, budget_bytes // per_row)
    best = 1
    for t in range(1, H + 1):
        if H % t == 0 and t <= max_rows:
            best = t
    return best


def _wrapped_kernel(x0_ref, x1_ref, x2_ref, wc_ref, wf_ref, bf_ref,
                    out_ref, acc_ref, *, width):
    """One (batch, row-tile) grid step: conv3x3 + bias + ReLU + pool + head."""
    r = pl.program_id(1)

    @pl.when(r == 0)
    def _init():
        acc_ref[...] = jnp.zeros_like(acc_ref)

    # Three row-shifted halo views (di) arrive as inputs; the three column
    # shifts (dj) of each are free VMEM slices -> all 9 conv taps, concatenated
    # on the channel axis, plus a ones column that carries the conv bias.
    rows = (x0_ref[...], x1_ref[...], x2_ref[...])   # each [tile_h, W+2, C] bf16
    pieces = [row[:, dj:dj + width, :] for row in rows for dj in range(3)]
    ones = jnp.ones(pieces[0].shape[:2] + (1,), dtype=pieces[0].dtype)
    patches = jnp.concatenate(pieces + [ones], axis=-1)    # [tile_h, W, 9C+1]
    patches = patches.reshape(-1, patches.shape[-1])        # [tile_h*W, 9C+1]

    # conv-as-matmul on the MXU: bf16 operands, f32 accumulation, lane-dense N.
    conv = jnp.dot(patches, wc_ref[...], preferred_element_type=jnp.float32)
    conv = jnp.maximum(conv, 0.0)                           # [tile_h*W, C_out_p]

    # Partial global-average-pool: accumulate per-tile channel sums (f32).
    # (The 1/(H*W) normalization is folded into wf in the wrapper.)
    acc_ref[...] += jnp.sum(conv, axis=0, keepdims=True)

    @pl.when(r == pl.num_programs(1) - 1)
    def _finalize():
        head = jnp.dot(acc_ref[...], wf_ref[...],
                       preferred_element_type=jnp.float32)
        out_ref[...] = (head + bf_ref[...]).astype(out_ref.dtype)


def wrapped_model_forward(x_nchw, conv_w, conv_b, fc_w, fc_b):
    """WrappedModel(module).forward(x) == module(x).

    Inner module: Conv2d(C->C_out, 3, padding=1) -> ReLU -> GlobalAvgPool
                  -> Linear(C_out -> F).
    """
    B, C, H, W = x_nchw.shape
    c_out = conv_w.shape[0]
    feat = fc_w.shape[0]
    c_out_p = _pad_to_lane(c_out)
    feat_p = _pad_to_lane(feat)
    wp = W + 2
    k_aug = 9 * C + 1

    tile_h = _pick_tile_h(H, W, C, c_out_p)
    n_row_tiles = H // tile_h

    # ---- glue: NCHW -> NHWC, zero-pad, bf16, 3 row-shifted halo views ----
    x = jnp.transpose(x_nchw, (0, 2, 3, 1)).astype(jnp.bfloat16)
    xp = jnp.pad(x, ((0, 0), (1, 1), (1, 1), (0, 0)))       # [B, H+2, W+2, C]
    x0 = xp[:, 0:H]                                          # di = 0 rows
    x1 = xp[:, 1:H + 1]                                      # di = 1 rows
    x2 = xp[:, 2:H + 2]                                      # di = 2 rows

    # PyTorch conv weight [C_out, C, kh, kw] -> [(kh,kw,Cin), C_out] matching
    # the (di, dj, c) patch ordering; conv bias folded in as the last K row;
    # output channels zero-padded to 128 lanes; bf16 for the MXU.
    wc = jnp.transpose(conv_w, (2, 3, 1, 0)).reshape(9 * C, c_out)
    wc_aug = jnp.concatenate([wc, conv_b.reshape(1, c_out)], axis=0)
    wc_p = jnp.zeros((k_aug, c_out_p), jnp.float32).at[:, :c_out].set(wc_aug)
    wc_p = wc_p.astype(jnp.bfloat16)

    # Linear head [F, C_out] -> padded [C_out_p, F_p]; the 1/(H*W) pooling
    # normalization is folded into the weight so the kernel epilogue is just
    # matmul + bias. Stays f32 (tiny, runs once per batch element).
    inv_hw = 1.0 / float(H * W)
    wf_p = jnp.zeros((c_out_p, feat_p), jnp.float32)
    wf_p = wf_p.at[:c_out, :feat].set(fc_w.T * inv_hw)
    bf_p = jnp.zeros((1, feat_p), jnp.float32).at[0, :feat].set(fc_b)

    kernel = functools.partial(_wrapped_kernel, width=W)
    grid = (B, n_row_tiles)

    x_spec = pl.BlockSpec((None, tile_h, wp, C), lambda b, r: (b, r, 0, 0))

    out_p = pl.pallas_call(
        kernel,
        out_shape=jax.ShapeDtypeStruct((B, 1, feat_p), jnp.float32),
        grid_spec=pltpu.PrefetchScalarGridSpec(
            num_scalar_prefetch=0,
            grid=grid,
            in_specs=[
                x_spec, x_spec, x_spec,
                pl.BlockSpec((k_aug, c_out_p), lambda b, r: (0, 0)),
                pl.BlockSpec((c_out_p, feat_p), lambda b, r: (0, 0)),
                pl.BlockSpec((1, feat_p), lambda b, r: (0, 0)),
            ],
            out_specs=pl.BlockSpec((None, 1, feat_p), lambda b, r: (b, 0, 0)),
            scratch_shapes=[pltpu.VMEM((1, c_out_p), jnp.float32)],
        ),
        compiler_params=pltpu.CompilerParams(
            dimension_semantics=("parallel", "arbitrary"),
            vmem_limit_bytes=32 * 1024 * 1024,   # safe on v5e/v6e (128 MiB) and v7x (64 MiB)
        ),
    )(x0, x1, x2, wc_p, wf_p, bf_p)

    return out_p[:, 0, :feat]


if __name__ == "__main__":
    key = jax.random.PRNGKey(0)
    kx, kw1, kb1, kw2, kb2 = jax.random.split(key, 5)

    B, C, H, W = 2, 4, 16, 16
    C_OUT, FEAT = 8, 32

    x = jax.random.normal(kx, (B, C, H, W), jnp.float32)
    conv_w = 0.1 * jax.random.normal(kw1, (C_OUT, C, 3, 3), jnp.float32)
    conv_b = 0.1 * jax.random.normal(kb1, (C_OUT,), jnp.float32)
    fc_w = 0.1 * jax.random.normal(kw2, (FEAT, C_OUT), jnp.float32)
    fc_b = 0.1 * jax.random.normal(kb2, (FEAT,), jnp.float32)

    out = wrapped_model_forward(x, conv_w, conv_b, fc_w, fc_b)
    out = jax.block_until_ready(out)

    # plain-JAX f32 reference of the same wrapped module (sanity check)
    conv_ref = jax.lax.conv_general_dilated(
        x, conv_w, window_strides=(1, 1), padding="SAME",
        dimension_numbers=("NCHW", "OIHW", "NCHW"))
    conv_ref = jnp.maximum(conv_ref + conv_b[None, :, None, None], 0.0)
    pooled_ref = conv_ref.mean(axis=(2, 3))
    ref = pooled_ref @ fc_w.T + fc_b

    assert out.shape == (B, FEAT)
    # bf16 conv operands -> slightly looser tolerance than pure f32.
    assert jnp.allclose(out, ref, rtol=2e-2, atol=2e-2), (
        float(jnp.max(jnp.abs(out - ref))))

    print("KERNEL_OK")
</pallas_src>

<mosaic_0001>
module attributes {stable_mosaic.version = 11 : i64} {
  func.func @_wrapped_kernel(%arg0: i32, %arg1: i32, %arg2: memref<1x16x18x4xbf16, #tpu.memory_space<vmem>>, %arg3: memref<1x16x18x4xbf16, #tpu.memory_space<vmem>>, %arg4: memref<1x16x18x4xbf16, #tpu.memory_space<vmem>>, %arg5: memref<37x128xbf16, #tpu.memory_space<vmem>>, %arg6: memref<128x128xf32, #tpu.memory_space<vmem>>, %arg7: memref<1x128xf32, #tpu.memory_space<vmem>>, %arg8: memref<1x1x128xf32, #tpu.memory_space<vmem>>, %arg9: memref<1x128xf32, #tpu.memory_space<vmem>>) attributes {dimension_semantics = [#tpu.dimension_semantics<parallel>, #tpu.dimension_semantics<arbitrary>], iteration_bounds = array<i64: 2, 1>, scalar_prefetch = 0 : i64, scratch_operands = 1 : i64, tpu.core_type = #tpu.core_type<tc>, window_params = [{transform_indices = @transform_0, window_bounds = array<i64: 1, 16, 18, 4>}, {transform_indices = @transform_1, window_bounds = array<i64: 1, 16, 18, 4>}, {transform_indices = @transform_2, window_bounds = array<i64: 1, 16, 18, 4>}, {pipeline_mode = #tpu.pipeline_mode<synchronous>, transform_indices = @transform_3, window_bounds = array<i64: 37, 128>}, {pipeline_mode = #tpu.pipeline_mode<synchronous>, transform_indices = @transform_4, window_bounds = array<i64: 128, 128>}, {pipeline_mode = #tpu.pipeline_mode<synchronous>, transform_indices = @transform_5, window_bounds = array<i64: 1, 128>}, {transform_indices = @transform_6, window_bounds = array<i64: 1, 1, 128>}]} {
    %c0_i32 = arith.constant 0 : i32
    %0 = arith.cmpi eq, %arg1, %c0_i32 : i32
    %1 = arith.extui %0 : i1 to i32
    %c0_i32_0 = arith.constant 0 : i32
    %2 = arith.cmpi ne, %1, %c0_i32_0 : i32
    scf.if %2 {
      %cst_23 = arith.constant 0.000000e+00 : f32
      %33 = vector.broadcast %cst_23 : f32 to vector<1x128xf32>
      %c0_24 = arith.constant 0 : index
      %c0_25 = arith.constant 0 : index
      %34 = vector.load %arg9[%c0_24, %c0_25] : memref<1x128xf32, #tpu.memory_space<vmem>>, vector<1x128xf32>
      tpu.vector_store %arg9[%c0_24, %c0_25], %33 {strides = array<i32>} : memref<1x128xf32, #tpu.memory_space<vmem>>, vector<1x128xf32>,
    } else {
    }
    %c0 = arith.constant 0 : index
    %c0_1 = arith.constant 0 : index
    %c0_2 = arith.constant 0 : index
    %c0_3 = arith.constant 0 : index
    %3 = vector.load %arg2[%c0, %c0_1, %c0_2, %c0_3] : memref<1x16x18x4xbf16, #tpu.memory_space<vmem>>, vector<1x16x18x4xbf16>
    %4 = vector.shape_cast %3 : vector<1x16x18x4xbf16> to vector<16x18x4xbf16>
    %c0_4 = arith.constant 0 : index
    %c0_5 = arith.constant 0 : index
    %c0_6 = arith.constant 0 : index
    %c0_7 = arith.constant 0 : index
    %5 = vector.load %arg3[%c0_4, %c0_5, %c0_6, %c0_7] : memref<1x16x18x4xbf16, #tpu.memory_space<vmem>>, vector<1x16x18x4xbf16>
    %6 = vector.shape_cast %5 : vector<1x16x18x4xbf16> to vector<16x18x4xbf16>
    %c0_8 = arith.constant 0 : index
    %c0_9 = arith.constant 0 : index
    %c0_10 = arith.constant 0 : index
    %c0_11 = arith.constant 0 : index
    %7 = vector.load %arg4[%c0_8, %c0_9, %c0_10, %c0_11] : memref<1x16x18x4xbf16, #tpu.memory_space<vmem>>, vector<1x16x18x4xbf16>
    %8 = vector.shape_cast %7 : vector<1x16x18x4xbf16> to vector<16x18x4xbf16>
    %9 = vector.extract_strided_slice %4 {offsets = [0, 0, 0], sizes = [16, 16, 4], strides = [1, 1, 1]} : vector<16x18x4xbf16> to vector<16x16x4xbf16>
    %10 = vector.extract_strided_slice %4 {offsets = [0, 1, 0], sizes = [16, 16, 4], strides = [1, 1, 1]} : vector<16x18x4xbf16> to vector<16x16x4xbf16>
    %11 = vector.extract_strided_slice %4 {offsets = [0, 2, 0], sizes = [16, 16, 4], strides = [1, 1, 1]} : vector<16x18x4xbf16> to vector<16x16x4xbf16>
    %12 = vector.extract_strided_slice %6 {offsets = [0, 0, 0], sizes = [16, 16, 4], strides = [1, 1, 1]} : vector<16x18x4xbf16> to vector<16x16x4xbf16>
    %13 = vector.extract_strided_slice %6 {offsets = [0, 1, 0], sizes = [16, 16, 4], strides = [1, 1, 1]} : vector<16x18x4xbf16> to vector<16x16x4xbf16>
    %14 = vector.extract_strided_slice %6 {offsets = [0, 2, 0], sizes = [16, 16, 4], strides = [1, 1, 1]} : vector<16x18x4xbf16> to vector<16x16x4xbf16>
    %15 = vector.extract_strided_slice %8 {offsets = [0, 0, 0], sizes = [16, 16, 4], strides = [1, 1, 1]} : vector<16x18x4xbf16> to vector<16x16x4xbf16>
    %16 = vector.extract_strided_slice %8 {offsets = [0, 1, 0], sizes = [16, 16, 4], strides = [1, 1, 1]} : vector<16x18x4xbf16> to vector<16x16x4xbf16>
    %17 = vector.extract_strided_slice %8 {offsets = [0, 2, 0], sizes = [16, 16, 4], strides = [1, 1, 1]} : vector<16x18x4xbf16> to vector<16x16x4xbf16>
    %cst = arith.constant 1.000000e+00 : bf16
    %18 = vector.broadcast %cst : bf16 to vector<16x16x1xbf16>
    %19 = tpu.concatenate %9, %10, %11, %12, %13, %14, %15, %16, %17, %18 in 2 : vector<16x16x4xbf16>, vector<16x16x4xbf16>, vector<16x16x4xbf16>, vector<16x16x4xbf16>, vector<16x16x4xbf16>, vector<16x16x4xbf16>, vector<16x16x4xbf16>, vector<16x16x4xbf16>, vector<16x16x4xbf16>, vector<16x16x1xbf16> -> vector<16x16x37xbf16>
    %20 = vector.shape_cast %19 : vector<16x16x37xbf16> to vector<256x37xbf16>
    %c0_12 = arith.constant 0 : index
    %c0_13 = arith.constant 0 : index
    %21 = vector.load %arg5[%c0_12, %c0_13] : memref<37x128xbf16, #tpu.memory_space<vmem>>, vector<37x128xbf16>
    %cst_14 = arith.constant dense<0.000000e+00> : vector<256x128xf32>
    %22 = tpu.matmul %20, %21, %cst_14 {dimension_numbers = #tpu.dot_dimension_numbers<[1], [0], [0], [1], [0, 0, 1, 1], [], []>} : vector<256x37xbf16>, vector<37x128xbf16>, vector<256x128xf32> -> vector<256x128xf32>
    %cst_15 = arith.constant 0.000000e+00 : f32
    %23 = vector.broadcast %cst_15 : f32 to vector<256x128xf32>
    %24 = arith.maximumf %22, %23 : vector<256x128xf32>
    %c0_16 = arith.constant 0 : index
    %c0_17 = arith.constant 0 : index
    %25 = vector.load %arg9[%c0_16, %c0_17] : memref<1x128xf32, #tpu.memory_space<vmem>>, vector<1x128xf32>
    %cst_18 = arith.constant dense<0.000000e+00> : vector<128xf32>
    %26 = vector.multi_reduction <add>, %24, %cst_18 [0] : vector<256x128xf32> to vector<128xf32>
    %27 = vector.shape_cast %26 : vector<128xf32> to vector<1x128xf32>
    %28 = arith.addf %25, %27 : vector<1x128xf32>
    %c0_19 = arith.constant 0 : index
    %c0_20 = arith.constant 0 : index
    %29 = vector.load %arg9[%c0_19, %c0_20] : memref<1x128xf32, #tpu.memory_space<vmem>>, vector<1x128xf32>
    tpu.vector_store %arg9[%c0_19, %c0_20], %28 {strides = array<i32>} : memref<1x128xf32, #tpu.memory_space<vmem>>, vector<1x128xf32>,
    %c0_i32_21 = arith.constant 0 : i32
    %30 = arith.cmpi eq, %arg1, %c0_i32_21 : i32
    %31 = arith.extui %30 : i1 to i32
    %c0_i32_22 = arith.constant 0 : i32
    %32 = arith.cmpi ne, %31, %c0_i32_22 : i32
    scf.if %32 {
      %c0_23 = arith.constant 0 : index
      %c0_24 = arith.constant 0 : index
      %33 = vector.load %arg9[%c0_23, %c0_24] : memref<1x128xf32, #tpu.memory_space<vmem>>, vector<1x128xf32>
      %c0_25 = arith.constant 0 : index
      %c0_26 = arith.constant 0 : index
      %34 = vector.load %arg6[%c0_25, %c0_26] : memref<128x128xf32, #tpu.memory_space<vmem>>, vector<128x128xf32>
      %cst_27 = arith.constant dense<0.000000e+00> : vector<1x128xf32>
      %35 = tpu.matmul %33, %34, %cst_27 {dimension_numbers = #tpu.dot_dimension_numbers<[1], [0], [0], [1], [0, 0, 1, 1], [], []>} : vector<1x128xf32>, vector<128x128xf32>, vector<1x128xf32> -> vector<1x128xf32>
      %c0_28 = arith.constant 0 : index
      %c0_29 = arith.constant 0 : index
      %36 = vector.load %arg7[%c0_28, %c0_29] : memref<1x128xf32, #tpu.memory_space<vmem>>, vector<1x128xf32>
      %37 = arith.addf %35, %36 : vector<1x128xf32>
      %c0_30 = arith.constant 0 : index
      %c0_31 = arith.constant 0 : index
      %c0_32 = arith.constant 0 : index
      %38 = vector.load %arg8[%c0_30, %c0_31, %c0_32] : memref<1x1x128xf32, #tpu.memory_space<vmem>>, vector<1x1x128xf32>
      %39 = vector.shape_cast %38 : vector<1x1x128xf32> to vector<1x128xf32>
      %40 = vector.shape_cast %37 : vector<1x128xf32> to vector<1x1x128xf32>
      tpu.vector_store %arg8[%c0_30, %c0_31, %c0_32], %40 {strides = array<i32>} : memref<1x1x128xf32, #tpu.memory_space<vmem>>, vector<1x1x128xf32>,
    } else {
    }
    return
  }
  func.func @transform_0(%arg0: i32, %arg1: i32) -> (i32, i32, i32, i32) {
    %c0_i32 = arith.constant 0 : i32
    %c0_i32_0 = arith.constant 0 : i32
    %c0_i32_1 = arith.constant 0 : i32
    return %arg0, %arg1, %c0_i32, %c0_i32_0 : i32, i32, i32, i32
  }
  func.func @transform_1(%arg0: i32, %arg1: i32) -> (i32, i32, i32, i32) {
    %c0_i32 = arith.constant 0 : i32
    %c0_i32_0 = arith.constant 0 : i32
    %c0_i32_1 = arith.constant 0 : i32
    return %arg0, %arg1, %c0_i32, %c0_i32_0 : i32, i32, i32, i32
  }
  func.func @transform_2(%arg0: i32, %arg1: i32) -> (i32, i32, i32, i32) {
    %c0_i32 = arith.constant 0 : i32
    %c0_i32_0 = arith.constant 0 : i32
    %c0_i32_1 = arith.constant 0 : i32
    return %arg0, %arg1, %c0_i32, %c0_i32_0 : i32, i32, i32, i32
  }
  func.func @transform_3(%arg0: i32, %arg1: i32) -> (i32, i32) {
    %c0_i32 = arith.constant 0 : i32
    %c0_i32_0 = arith.constant 0 : i32
    %c0_i32_1 = arith.constant 0 : i32
    return %c0_i32, %c0_i32_0 : i32, i32
  }
  func.func @transform_4(%arg0: i32, %arg1: i32) -> (i32, i32) {
    %c0_i32 = arith.constant 0 : i32
    %c0_i32_0 = arith.constant 0 : i32
    %c0_i32_1 = arith.constant 0 : i32
    return %c0_i32, %c0_i32_0 : i32, i32
  }
  func.func @transform_5(%arg0: i32, %arg1: i32) -> (i32, i32) {
    %c0_i32 = arith.constant 0 : i32
    %c0_i32_0 = arith.constant 0 : i32
    %c0_i32_1 = arith.constant 0 : i32
    return %c0_i32, %c0_i32_0 : i32, i32
  }
  func.func @transform_6(%arg0: i32, %arg1: i32) -> (i32, i32, i32) {
    %c0_i32 = arith.constant 0 : i32
    %c0_i32_0 = arith.constant 0 : i32
    %c0_i32_1 = arith.constant 0 : i32
    return %arg0, %c0_i32, %c0_i32_0 : i32, i32, i32
  }
}

</mosaic_0001>

<llo_original>
// kernel: tpu_custom_call.1
$region0: #{tpu_custom_call.1}
  #allocation0 [shape = 'u32[]', space=smem, size = 0x4, offset = 0x4, fixed_abs, tag = 'smem constant byte address 0x4 - core index']
  #allocation1 [shape = 'u32[144,128]{1,0:T(1,128)}', space=vmem, size = 0x12000, scoped, tag = 'internal scratch']
  #allocation2 [shape = 'f32[1,128]{1,0:T(1,128)}', space=vmem, size = 0x200, scoped, tag = 'scratch operand']
  %s0 = inlined_call_operand.vmem [shape: bf16[2,16,18,4], index: 0, kind: input, shape index: {}]
  %s1 = inlined_call_operand.vmem [shape: bf16[2,16,18,4], index: 1, kind: input, shape index: {}]
  %s2 = inlined_call_operand.vmem [shape: bf16[2,16,18,4], index: 2, kind: input, shape index: {}]
  %s3 = inlined_call_operand.vmem [shape: bf16[37,128], index: 3, kind: input, shape index: {}]
  %s4 = inlined_call_operand.vmem [shape: f32[128,128], index: 4, kind: input, shape index: {}]
  %s5 = inlined_call_operand.vmem [shape: f32[1,128], index: 5, kind: input, shape index: {}]
  %s6 = inlined_call_operand.hbm [shape: f32[2,1,128], index: 6, kind: output, shape index: {}]
  %s7 = sld [smem:[#allocation0]]
  $region65: #{tpu_custom_call.1} parent=0
    _
  %s9 = ssub.s32 1, %s7
  %s10 = scalar_select 0, %s9, %s7
  $region1: #{tpu_custom_call.1} parent=0
    #allocation3 [shape = 'u8[1024]{0}', space=vmem, size = 0x400, scoped, tag = 'output window, operand 0']
    #allocation4 [shape = 's32[2]{0}', space=sflag, size = 0x8, scoped, tag = 'scoped memory for tpu_custom_call.1']
    %11 = vsyncpa [#allocation4], 0
    %s12 = scalar_lea.sflag [#allocation4], 1
    %13 = vsyncpa %s12, 0
    loop: start=0, step=1, limit=4
    $region2: #{tpu_custom_call.1} parent=1 // loop_pre_header
      _
    $region3: #{tpu_custom_call.1} parent=1 // loop_header
      %s15 = sphi 0, %s19
      %p16 = scmp.ge.s32.totalorder %s15, 4
      %s22 = sphi 0, %s34
      %s23 = sphi 0, %s30
      %s24 = sphi 0, %s22
      %s25 = sphi 0, %s23
      %s26 = sphi 0, %s24
      %s27 = sphi 0, %s25
      %s39 = sphi 0, %s41
      %s42 = sphi 0, %s39
      %s43 = sphi 0, %s42
      %s59 = sphi 0, %s43
      %s67 = sphi 0, %s69
      %s70 = sphi 0, %s67
      %s71 = sphi 0, %s70
      %s87 = sphi 0, %s71
      %s95 = sphi 0, %s97
      %s98 = sphi 0, %s95
      %s99 = sphi 0, %s98
      %s115 = sphi 0, %s99
      %s119 = sphi 0, %s119
      %s121 = sphi 0, %s119
      %s122 = sphi 0, %s121
      %s136 = sphi 0, %s122
      %s140 = sphi 0, %s140
      %s142 = sphi 0, %s140
      %s143 = sphi 0, %s142
      %s157 = sphi 0, %s143
      %s161 = sphi 0, %s161
      %s163 = sphi 0, %s161
      %s164 = sphi 0, %s163
      %s178 = sphi 0, %s164
      %s184 = sphi 0, %s186
      %s187 = sphi 0, %s184
      %s188 = sphi 0, %s187
      %s204 = sphi 0, %s188
    $region4: #{tpu_custom_call.1} parent=1 // loop_header_branch
      %18 = sbr.rel (%p16) target = $region8
    $region5: #{tpu_custom_call.1} parent=1 // loop_body
      %s20 = ssub.s32 %s15, 1
      %s21 = ssub.s32 %s15, 2
      %s28 = sadd.s32 1, %s23
      %p29 = scmp.ge.s32.totalorder %s28, 1
      %s30 = scalar_select %p29, 0, %s28
      %s31 = sadd.s32 1, %s22
      %s32 = scalar_select %p29, %s31, %s22
      %p33 = scmp.ge.s32.totalorder %s32, 2
      %s34 = scalar_select %p33, 0, %s32
      %s35 = ssub.s32 %s22, %s34
      %s36 = ssub.s32 %s23, %s30
      %s37 = sor.u32 %s35, %s36
      %p38 = scmp.eq.s32.totalorder %s37, 0
      %s40 = sadd.s32 %s39, 1
      %s41 = scalar_select %p38, %s39, %s40
      %p44 = pneg %p38
      %p45 = scmp.eq.s32.totalorder %s15, 1
      %p46 = por %p44, %p45
      %p47 = scmp.ne.s32.totalorder %s39, %s42
      %p48 = scmp.eq.s32.totalorder %s15, 0
      %p49 = por %p47, %p48
      %p50 = scmp.ne.s32.totalorder %s39, %s42
      %p51 = scmp.eq.s32.totalorder %s20, 1
      %p52 = por %p50, %p51
      %p53 = scmp.ne.s32.totalorder %s42, %s43
      %p54 = scmp.eq.s32.totalorder %s20, 0
      %p55 = por %p53, %p54
      %p56 = scmp.ne.s32.totalorder %s42, %s43
      %p57 = scmp.eq.s32.totalorder %s21, 1
      %p58 = por %p56, %p57
      %p60 = scmp.ne.s32.totalorder %s43, %s59
      %p61 = scmp.eq.s32.totalorder %s21, 0
      %p62 = por %p60, %p61
      %s63 = ssub.s32 %s22, %s34
      %s64 = ssub.s32 %s23, %s30
      %s65 = sor.u32 %s63, %s64
      %p66 = scmp.eq.s32.totalorder %s65, 0
      %s68 = sadd.s32 %s67, 1
      %s69 = scalar_select %p66, %s67, %s68
      %p72 = pneg %p66
      %p73 = scmp.eq.s32.totalorder %s15, 1
      %p74 = por %p72, %p73
      %p75 = scmp.ne.s32.totalorder %s67, %s70
      %p76 = scmp.eq.s32.totalorder %s15, 0
      %p77 = por %p75, %p76
      %p78 = scmp.ne.s32.totalorder %s67, %s70
      %p79 = scmp.eq.s32.totalorder %s20, 1
      %p80 = por %p78, %p79
      %p81 = scmp.ne.s32.totalorder %s70, %s71
      %p82 = scmp.eq.s32.totalorder %s20, 0
      %p83 = por %p81, %p82
      %p84 = scmp.ne.s32.totalorder %s70, %s71
      %p85 = scmp.eq.s32.totalorder %s21, 1
      %p86 = por %p84, %p85
      %p88 = scmp.ne.s32.totalorder %s71, %s87
      %p89 = scmp.eq.s32.totalorder %s21, 0
      %p90 = por %p88, %p89
      %s91 = ssub.s32 %s22, %s34
      %s92 = ssub.s32 %s23, %s30
      %s93 = sor.u32 %s91, %s92
      %p94 = scmp.eq.s32.totalorder %s93, 0
      %s96 = sadd.s32 %s95, 1
      %s97 = scalar_select %p94, %s95, %s96
      %p100 = pneg %p94
      %p101 = scmp.eq.s32.totalorder %s15, 1
      %p102 = por %p100, %p101
      %p103 = scmp.ne.s32.totalorder %s95, %s98
      %p104 = scmp.eq.s32.totalorder %s15, 0
      %p105 = por %p103, %p104
      %p106 = scmp.ne.s32.totalorder %s95, %s98
      %p107 = scmp.eq.s32.totalorder %s20, 1
      %p108 = por %p106, %p107
      %p109 = scmp.ne.s32.totalorder %s98, %s99
      %p110 = scmp.eq.s32.totalorder %s20, 0
      %p111 = por %p109, %p110
      %p112 = scmp.ne.s32.totalorder %s98, %s99
      %p113 = scmp.eq.s32.totalorder %s21, 1
      %p114 = por %p112, %p113
      %p116 = scmp.ne.s32.totalorder %s99, %s115
      %p117 = scmp.eq.s32.totalorder %s21, 0
      %p118 = por %p116, %p117
      %s120 = sadd.s32 %s119, 1
      %p123 = scmp.eq.s32.totalorder %s15, 1
      %p124 = scmp.ne.s32.totalorder %s119, %s121
      %p125 = scmp.eq.s32.totalorder %s15, 0
      %p126 = por %p124, %p125
      %p127 = scmp.ne.s32.totalorder %s119, %s121
      %p128 = scmp.eq.s32.totalorder %s20, 1
      %p129 = por %p127, %p128
      %p130 = scmp.ne.s32.totalorder %s121, %s122
      %p131 = scmp.eq.s32.totalorder %s20, 0
      %p132 = por %p130, %p131
      %p133 = scmp.ne.s32.totalorder %s121, %s122
      %p134 = scmp.eq.s32.totalorder %s21, 1
      %p135 = por %p133, %p134
      %p137 = scmp.ne.s32.totalorder %s122, %s136
      %p138 = scmp.eq.s32.totalorder %s21, 0
      %p139 = por %p137, %p138
      %s141 = sadd.s32 %s140, 1
      %p144 = scmp.eq.s32.totalorder %s15, 1
      %p145 = scmp.ne.s32.totalorder %s140, %s142
      %p146 = scmp.eq.s32.totalorder %s15, 0
      %p147 = por %p145, %p146
      %p148 = scmp.ne.s32.totalorder %s140, %s142
      %p149 = scmp.eq.s32.totalorder %s20, 1
      %p150 = por %p148, %p149
      %p151 = scmp.ne.s32.totalorder %s142, %s143
      %p152 = scmp.eq.s32.totalorder %s20, 0
      %p153 = por %p151, %p152
      %p154 = scmp.ne.s32.totalorder %s142, %s143
      %p155 = scmp.eq.s32.totalorder %s21, 1
      %p156 = por %p154, %p155
      %p158 = scmp.ne.s32.totalorder %s143, %s157
      %p159 = scmp.eq.s32.totalorder %s21, 0
      %p160 = por %p158, %p159
      %s162 = sadd.s32 %s161, 1
      %p165 = scmp.eq.s32.totalorder %s15, 1
      %p166 = scmp.ne.s32.totalorder %s161, %s163
      %p167 = scmp.eq.s32.totalorder %s15, 0
      %p168 = por %p166, %p167
      %p169 = scmp.ne.s32.totalorder %s161, %s163
      %p170 = scmp.eq.s32.totalorder %s20, 1
      %p171 = por %p169, %p170
      %p172 = scmp.ne.s32.totalorder %s163, %s164
      %p173 = scmp.eq.s32.totalorder %s20, 0
      %p174 = por %p172, %p173
      %p175 = scmp.ne.s32.totalorder %s163, %s164
      %p176 = scmp.eq.s32.totalorder %s21, 1
      %p177 = por %p175, %p176
      %p179 = scmp.ne.s32.totalorder %s164, %s178
      %p180 = scmp.eq.s32.totalorder %s21, 0
      %p181 = por %p179, %p180
      %s182 = ssub.s32 %s22, %s34
      %p183 = scmp.eq.s32.totalorder %s182, 0
      %s185 = sadd.s32 %s184, 1
      %s186 = scalar_select %p183, %s184, %s185
      %p189 = pneg %p183
      %p190 = scmp.eq.s32.totalorder %s15, 1
      %p191 = por %p189, %p190
      %p192 = scmp.ne.s32.totalorder %s184, %s187
      %p193 = scmp.eq.s32.totalorder %s15, 0
      %p194 = por %p192, %p193
      %p195 = scmp.ne.s32.totalorder %s184, %s187
      %p196 = scmp.eq.s32.totalorder %s20, 1
      %p197 = por %p195, %p196
      %p198 = scmp.ne.s32.totalorder %s187, %s188
      %p199 = scmp.eq.s32.totalorder %s20, 0
      %p200 = por %p198, %p199
      %p201 = scmp.ne.s32.totalorder %s187, %s188
      %p202 = scmp.eq.s32.totalorder %s21, 1
      %p203 = por %p201, %p202
      %p205 = scmp.ne.s32.totalorder %s188, %s204
      %p206 = scmp.eq.s32.totalorder %s21, 0
      %p207 = por %p205, %p206
      %p208 = scmp.le.s32.totalorder 1, %s15
      %p209 = scmp.lt.s32.totalorder %s15, 3
      %p210 = pnand %p208, %p209
      %p211 = pneg %p210
      // Predicated region
      $region9: #{tpu_custom_call.1} parent=5 // pred_check
        _
      $region10: #{tpu_custom_call.1} parent=5 // pred_check_branch
        %213 = sbr.rel (%p210) target = $region12
      $region11: #{tpu_custom_call.1} parent=5 // pred_region
        %s214 = ssub.s32 %s15, 1
        // Predicated region
        $region13: #{tpu_custom_call.1} parent=11 // pred_check
          %p215 = pneg %p132
        $region14: #{tpu_custom_call.1} parent=11 // pred_check_branch
          %217 = sbr.rel (%p215) target = $region16
        $region15: #{tpu_custom_call.1} parent=11 // pred_region
          _
        $region16: #{tpu_custom_call.1} parent=11 // pred_fallthru
          _
        // Predicated region
        $region17: #{tpu_custom_call.1} parent=11 // pred_check
          %p218 = pneg %p153
        $region18: #{tpu_custom_call.1} parent=11 // pred_check_branch
          %220 = sbr.rel (%p218) target = $region20
        $region19: #{tpu_custom_call.1} parent=11 // pred_region
          _
        $region20: #{tpu_custom_call.1} parent=11 // pred_fallthru
          _
        // Predicated region
        $region21: #{tpu_custom_call.1} parent=11 // pred_check
          %p221 = pneg %p174
        $region22: #{tpu_custom_call.1} parent=11 // pred_check_branch
          %223 = sbr.rel (%p221) target = $region24
        $region23: #{tpu_custom_call.1} parent=11 // pred_region
          _
        $region24: #{tpu_custom_call.1} parent=11 // pred_fallthru
          _
      $region12: #{tpu_custom_call.1} parent=5 // pred_fallthru
        _
      %p224 = scmp.lt.s32.totalorder %s15, 2
      // Predicated region
      $region25: #{tpu_custom_call.1} parent=5 // pred_check
        %p225 = pneg %p224
      $region26: #{tpu_custom_call.1} parent=5 // pred_check_branch
        %227 = sbr.rel (%p225) target = $region28
      $region27: #{tpu_custom_call.1} parent=5 // pred_region
        // Predicated region
        $region29: #{tpu_custom_call.1} parent=27 // pred_check
          %p228 = pneg %p49
        $region30: #{tpu_custom_call.1} parent=27 // pred_check_branch
          %230 = sbr.rel (%p228) target = $region32
        $region31: #{tpu_custom_call.1} parent=27 // pred_region
          %s231 = smul.u32 16, %s23
          %p232 = scmp.lt.s32.totalorder %s22, 1
          %s233 = scalar_select %p232, %s22, 1
          %p234 = scmp.lt.s32.totalorder %s231, 15
          %s235 = scalar_select %p234, %s231, 15
          %s236 = smul.addr %s235, 3
          %s237 = smul.addr %s233, 48
          %s238 = sadd.s32 %s236, %s237
          %s239 = smul.addr %s238, 4
          %s240 = scalar_lea.vmem %s0, %s239
          %s241 = smul.u32 16, %s23
        $region32: #{tpu_custom_call.1} parent=27 // pred_fallthru
          _
        // Predicated region
        $region33: #{tpu_custom_call.1} parent=27 // pred_check
          %p242 = pneg %p77
        $region34: #{tpu_custom_call.1} parent=27 // pred_check_branch
          %244 = sbr.rel (%p242) target = $region36
        $region35: #{tpu_custom_call.1} parent=27 // pred_region
          %s245 = smul.u32 16, %s23
          %p246 = scmp.lt.s32.totalorder %s22, 1
          %s247 = scalar_select %p246, %s22, 1
          %p248 = scmp.lt.s32.totalorder %s245, 15
          %s249 = scalar_select %p248, %s245, 15
          %s250 = smul.addr %s249, 3
          %s251 = smul.addr %s247, 48
          %s252 = sadd.s32 %s250, %s251
          %s253 = smul.addr %s252, 4
          %s254 = scalar_lea.vmem %s1, %s253
          %s255 = smul.u32 16, %s23
        $region36: #{tpu_custom_call.1} parent=27 // pred_fallthru
          _
        // Predicated region
        $region37: #{tpu_custom_call.1} parent=27 // pred_check
          %p256 = pneg %p105
        $region38: #{tpu_custom_call.1} parent=27 // pred_check_branch
          %258 = sbr.rel (%p256) target = $region40
        $region39: #{tpu_custom_call.1} parent=27 // pred_region
          %s259 = smul.u32 16, %s23
          %p260 = scmp.lt.s32.totalorder %s22, 1
          %s261 = scalar_select %p260, %s22, 1
          %p262 = scmp.lt.s32.totalorder %s259, 15
          %s263 = scalar_select %p262, %s259, 15
          %s264 = smul.addr %s263, 3
          %s265 = smul.addr %s261, 48
          %s266 = sadd.s32 %s264, %s265
          %s267 = smul.addr %s266, 4
          %s268 = scalar_lea.vmem %s2, %s267
          %s269 = smul.u32 16, %s23
        $region40: #{tpu_custom_call.1} parent=27 // pred_fallthru
          _
      $region28: #{tpu_custom_call.1} parent=5 // pred_fallthru
        _
      %p270 = scmp.le.s32.totalorder 1, %s15
      %p271 = scmp.lt.s32.totalorder %s15, 3
      %p272 = pnand %p270, %p271
      %p273 = pneg %p272
      // Predicated region
      $region41: #{tpu_custom_call.1} parent=5 // pred_check
        _
      $region42: #{tpu_custom_call.1} parent=5 // pred_check_branch
        %275 = sbr.rel (%p272) target = $region44
      $region43: #{tpu_custom_call.1} parent=5 // pred_region
        %s276 = ssub.s32 %s15, 1
        %s277 = smul.u32 16, %s25
        %p278 = scmp.lt.s32.totalorder %s24, 1
        %s279 = scalar_select %p278, %s24, 1
        %p280 = scmp.lt.s32.totalorder %s277, 15
        %s281 = scalar_select %p280, %s277, 15
        %s282 = smul.addr %s281, 3
        %s283 = smul.addr %s279, 48
        %s284 = sadd.s32 %s282, %s283
        %s285 = smul.addr %s284, 4
        %s286 = scalar_lea.vmem %s0, %s285
        %p287 = pneg %p55
        %p288 = pneg %p52
        %s289 = smul.u32 16, %s25
        %p290 = scmp.lt.s32.totalorder %s24, 1
        %s291 = scalar_select %p290, %s24, 1
        %p292 = scmp.lt.s32.totalorder %s289, 15
        %s293 = scalar_select %p292, %s289, 15
        %s294 = smul.addr %s293, 3
        %s295 = smul.addr %s291, 48
        %s296 = sadd.s32 %s294, %s295
        %s297 = smul.addr %s296, 4
        %s298 = scalar_lea.vmem %s1, %s297
        %p299 = pneg %p83
        %p300 = pneg %p80
        %s301 = smul.u32 16, %s25
        %p302 = scmp.lt.s32.totalorder %s24, 1
        %s303 = scalar_select %p302, %s24, 1
        %p304 = scmp.lt.s32.totalorder %s301, 15
        %s305 = scalar_select %p304, %s301, 15
        %s306 = smul.addr %s305, 3
        %s307 = smul.addr %s303, 48
        %s308 = sadd.s32 %s306, %s307
        %s309 = smul.addr %s308, 4
        %s310 = scalar_lea.vmem %s2, %s309
        %p311 = pneg %p111
        %p312 = pneg %p108
        %p313 = pneg %p132
        %p314 = pneg %p129
        %p315 = pneg %p153
        %p316 = pneg %p150
        %p317 = pneg %p174
        %p318 = pneg %p171
        %p319 = pneg %p200
        %p320 = pneg %p197
        %s321 = sand.u32 %s187, 1
        %s322 = scalar_lea.sflag [#allocation4], %s321
        %s323 = sand.u32 %s187, 1
        %s324 = scalar_lea.vmem [#allocation3], %s323
        %s325 = smul.u32 16, %s25
        %p326 = scmp.lt.s32.totalorder %s24, 1
        %s327 = scalar_select %p326, %s24, 1
        %p328 = scmp.lt.s32.totalorder %s325, 15
        %s329 = scalar_select %p328, %s325, 15
        %s330 = smul.addr %s329, 3
        %s331 = smul.addr %s327, 48
        %s332 = sadd.s32 %s330, %s331
        %s333 = smul.addr %s332, 4
        %s334 = scalar_lea.vmem %s0, %s333
        %s335 = smul.u32 16, %s25
        %s336 = smul.u32 16, %s25
        %p337 = scmp.lt.s32.totalorder %s24, 1
        %s338 = scalar_select %p337, %s24, 1
        %p339 = scmp.lt.s32.totalorder %s336, 15
        %s340 = scalar_select %p339, %s336, 15
        %s341 = smul.addr %s340, 3
        %s342 = smul.addr %s338, 48
        %s343 = sadd.s32 %s341, %s342
        %s344 = smul.addr %s343, 4
        %s345 = scalar_lea.vmem %s1, %s344
        %s346 = smul.u32 16, %s25
        %s347 = smul.u32 16, %s25
        %p348 = scmp.lt.s32.totalorder %s24, 1
        %s349 = scalar_select %p348, %s24, 1
        %p350 = scmp.lt.s32.totalorder %s347, 15
        %s351 = scalar_select %p350, %s347, 15
        %s352 = smul.addr %s351, 3
        %s353 = smul.addr %s349, 48
        %s354 = sadd.s32 %s352, %s353
        %s355 = smul.addr %s354, 4
        %s356 = scalar_lea.vmem %s2, %s355
        %s357 = smul.u32 16, %s25
        %p360 = scmp.eq.s32.totalorder %s25, 0
        // Predicated region
        $region45: #{tpu_custom_call.1} parent=43 // pred_check
          %p361 = pneg %p360
        $region46: #{tpu_custom_call.1} parent=43 // pred_check_branch
          %363 = sbr.rel (%p361) target = $region48
        $region47: #{tpu_custom_call.1} parent=43 // pred_region
          %364 = vst [vmem:[#allocation2] sm:$0x1] 0.0
        $region48: #{tpu_custom_call.1} parent=43 // pred_fallthru
          _
        %v365 = vld [vmem:[%s334] sm:$0xf]
        %v366 = vld [vmem:[%s334 + $0x4] sm:$0xf]
        %v367 = vld [vmem:[%s334 + $0x8] sm:$0x1]
        %v368 = vld [vmem:[%s334 + $0xc] sm:$0xf]
        %v369 = vld [vmem:[%s334 + $0x10] sm:$0xf]
        %v370 = vld [vmem:[%s334 + $0x14] sm:$0x1]
        %v371 = vld [vmem:[%s334 + $0x18] sm:$0xf]
        %v372 = vld [vmem:[%s334 + $0x1c] sm:$0xf]
        %v373 = vld [vmem:[%s334 + $0x20] sm:$0x1]
        %v374 = vld [vmem:[%s334 + $0x24] sm:$0xf]
        %v375 = vld [vmem:[%s334 + $0x28] sm:$0xf]
        %v376 = vld [vmem:[%s334 + $0x2c] sm:$0x1]
        %v377 = vld [vmem:[%s334 + $0x30] sm:$0xf]
        %v378 = vld [vmem:[%s334 + $0x34] sm:$0xf]
        %v379 = vld [vmem:[%s334 + $0x38] sm:$0x1]
        %v380 = vld [vmem:[%s334 + $0x3c] sm:$0xf]
        %v381 = vld [vmem:[%s334 + $0x40] sm:$0xf]
        %v382 = vld [vmem:[%s334 + $0x44] sm:$0x1]
        %v383 = vld [vmem:[%s334 + $0x48] sm:$0xf]
        %v384 = vld [vmem:[%s334 + $0x4c] sm:$0xf]
        %v385 = vld [vmem:[%s334 + $0x50] sm:$0x1]
        %v386 = vld [vmem:[%s334 + $0x54] sm:$0xf]
        %v387 = vld [vmem:[%s334 + $0x58] sm:$0xf]
        %v388 = vld [vmem:[%s334 + $0x5c] sm:$0x1]
        %v389 = vld [vmem:[%s334 + $0x60] sm:$0xf]
        %v390 = vld [vmem:[%s334 + $0x64] sm:$0xf]
        %v391 = vld [vmem:[%s334 + $0x68] sm:$0x1]
        %v392 = vld [vmem:[%s334 + $0x6c] sm:$0xf]
        %v393 = vld [vmem:[%s334 + $0x70] sm:$0xf]
        %v394 = vld [vmem:[%s334 + $0x74] sm:$0x1]
        %v395 = vld [vmem:[%s334 + $0x78] sm:$0xf]
        %v396 = vld [vmem:[%s334 + $0x7c] sm:$0xf]
        %v397 = vld [vmem:[%s334 + $0x80] sm:$0x1]
        %v398 = vld [vmem:[%s334 + $0x84] sm:$0xf]
        %v399 = vld [vmem:[%s334 + $0x88] sm:$0xf]
        %v400 = vld [vmem:[%s334 + $0x8c] sm:$0x1]
        %v401 = vld [vmem:[%s334 + $0x90] sm:$0xf]
        %v402 = vld [vmem:[%s334 + $0x94] sm:$0xf]
        %v403 = vld [vmem:[%s334 + $0x98] sm:$0x1]
        %v404 = vld [vmem:[%s334 + $0x9c] sm:$0xf]
        %v405 = vld [vmem:[%s334 + $0xa0] sm:$0xf]
        %v406 = vld [vmem:[%s334 + $0xa4] sm:$0x1]
        %v407 = vld [vmem:[%s334 + $0xa8] sm:$0xf]
        %v408 = vld [vmem:[%s334 + $0xac] sm:$0xf]
        %v409 = vld [vmem:[%s334 + $0xb0] sm:$0x1]
        %v410 = vld [vmem:[%s334 + $0xb4] sm:$0xf]
        %v411 = vld [vmem:[%s334 + $0xb8] sm:$0xf]
        %v412 = vld [vmem:[%s334 + $0xbc] sm:$0x1]
        %v413 = vld [vmem:[%s345] sm:$0xf]
        %v414 = vld [vmem:[%s345 + $0x4] sm:$0xf]
        %v415 = vld [vmem:[%s345 + $0x8] sm:$0x1]
        %v416 = vld [vmem:[%s345 + $0xc] sm:$0xf]
        %v417 = vld [vmem:[%s345 + $0x10] sm:$0xf]
        %v418 = vld [vmem:[%s345 + $0x14] sm:$0x1]
        %v419 = vld [vmem:[%s345 + $0x18] sm:$0xf]
        %v420 = vld [vmem:[%s345 + $0x1c] sm:$0xf]
        %v421 = vld [vmem:[%s345 + $0x20] sm:$0x1]
        %v422 = vld [vmem:[%s345 + $0x24] sm:$0xf]
        %v423 = vld [vmem:[%s345 + $0x28] sm:$0xf]
        %v424 = vld [vmem:[%s345 + $0x2c] sm:$0x1]
        %v425 = vld [vmem:[%s345 + $0x30] sm:$0xf]
        %v426 = vld [vmem:[%s345 + $0x34] sm:$0xf]
        %v427 = vld [vmem:[%s345 + $0x38] sm:$0x1]
        %v428 = vld [vmem:[%s345 + $0x3c] sm:$0xf]
        %v429 = vld [vmem:[%s345 + $0x40] sm:$0xf]
        %v430 = vld [vmem:[%s345 + $0x44] sm:$0x1]
        %v431 = vld [vmem:[%s345 + $0x48] sm:$0xf]
        %v432 = vld [vmem:[%s345 + $0x4c] sm:$0xf]
        %v433 = vld [vmem:[%s345 + $0x50] sm:$0x1]
        %v434 = vld [vmem:[%s345 + $0x54] sm:$0xf]
        %v435 = vld [vmem:[%s345 + $0x58] sm:$0xf]
        %v436 = vld [vmem:[%s345 + $0x5c] sm:$0x1]
        %v437 = vld [vmem:[%s345 + $0x60] sm:$0xf]
        %v438 = vld [vmem:[%s345 + $0x64] sm:$0xf]
        %v439 = vld [vmem:[%s345 + $0x68] sm:$0x1]
        %v440 = vld [vmem:[%s345 + $0x6c] sm:$0xf]
        %v441 = vld [vmem:[%s345 + $0x70] sm:$0xf]
        %v442 = vld [vmem:[%s345 + $0x74] sm:$0x1]
        %v443 = vld [vmem:[%s345 + $0x78] sm:$0xf]
        %v444 = vld [vmem:[%s345 + $0x7c] sm:$0xf]
        %v445 = vld [vmem:[%s345 + $0x80] sm:$0x1]
        %v446 = vld [vmem:[%s345 + $0x84] sm:$0xf]
        %v447 = vld [vmem:[%s345 + $0x88] sm:$0xf]
        %v448 = vld [vmem:[%s345 + $0x8c] sm:$0x1]
        %v449 = vld [vmem:[%s345 + $0x90] sm:$0xf]
        %v450 = vld [vmem:[%s345 + $0x94] sm:$0xf]
        %v451 = vld [vmem:[%s345 + $0x98] sm:$0x1]
        %v452 = vld [vmem:[%s345 + $0x9c] sm:$0xf]
        %v453 = vld [vmem:[%s345 + $0xa0] sm:$0xf]
        %v454 = vld [vmem:[%s345 + $0xa4] sm:$0x1]
        %v455 = vld [vmem:[%s345 + $0xa8] sm:$0xf]
        %v456 = vld [vmem:[%s345 + $0xac] sm:$0xf]
        %v457 = vld [vmem:[%s345 + $0xb0] sm:$0x1]
        %v458 = vld [vmem:[%s345 + $0xb4] sm:$0xf]
        %v459 = vld [vmem:[%s345 + $0xb8] sm:$0xf]
        %v460 = vld [vmem:[%s345 + $0xbc] sm:$0x1]
        %v461 = vld [vmem:[%s356] sm:$0xf]
        %v462 = vld [vmem:[%s356 + $0x4] sm:$0xf]
        %v463 = vld [vmem:[%s356 + $0x8] sm:$0x1]
        %v464 = vld [vmem:[%s356 + $0xc] sm:$0xf]
        %v465 = vld [vmem:[%s356 + $0x10] sm:$0xf]
        %v466 = vld [vmem:[%s356 + $0x14] sm:$0x1]
        %v467 = vld [vmem:[%s356 + $0x18] sm:$0xf]
        %v468 = vld [vmem:[%s356 + $0x1c] sm:$0xf]
        %v469 = vld [vmem:[%s356 + $0x20] sm:$0x1]
        %v470 = vld [vmem:[%s356 + $0x24] sm:$0xf]
        %v471 = vld [vmem:[%s356 + $0x28] sm:$0xf]
        %v472 = vld [vmem:[%s356 + $0x2c] sm:$0x1]
        %v473 = vld [vmem:[%s356 + $0x30] sm:$0xf]
        %v474 = vld [vmem:[%s356 + $0x34] sm:$0xf]
        %v475 = vld [vmem:[%s356 + $0x38] sm:$0x1]
        %v476 = vld [vmem:[%s356 + $0x3c] sm:$0xf]
        %v477 = vld [vmem:[%s356 + $0x40] sm:$0xf]
        %v478 = vld [vmem:[%s356 + $0x44] sm:$0x1]
        %v479 = vld [vmem:[%s356 + $0x48] sm:$0xf]
        %v480 = vld [vmem:[%s356 + $0x4c] sm:$0xf]
        %v481 = vld [vmem:[%s356 + $0x50] sm:$0x1]
        %v482 = vld [vmem:[%s356 + $0x54] sm:$0xf]
        %v483 = vld [vmem:[%s356 + $0x58] sm:$0xf]
        %v484 = vld [vmem:[%s356 + $0x5c] sm:$0x1]
        %v485 = vld [vmem:[%s356 + $0x60] sm:$0xf]
        %v486 = vld [vmem:[%s356 + $0x64] sm:$0xf]
        %v487 = vld [vmem:[%s356 + $0x68] sm:$0x1]
        %v488 = vld [vmem:[%s356 + $0x6c] sm:$0xf]
        %v489 = vld [vmem:[%s356 + $0x70] sm:$0xf]
        %v490 = vld [vmem:[%s356 + $0x74] sm:$0x1]
        %v491 = vld [vmem:[%s356 + $0x78] sm:$0xf]
        %v492 = vld [vmem:[%s356 + $0x7c] sm:$0xf]
        %v493 = vld [vmem:[%s356 + $0x80] sm:$0x1]
        %v494 = vld [vmem:[%s356 + $0x84] sm:$0xf]
        %v495 = vld [vmem:[%s356 + $0x88] sm:$0xf]
        %v496 = vld [vmem:[%s356 + $0x8c] sm:$0x1]
        %v497 = vld [vmem:[%s356 + $0x90] sm:$0xf]
        %v498 = vld [vmem:[%s356 + $0x94] sm:$0xf]
        %v499 = vld [vmem:[%s356 + $0x98] sm:$0x1]
        %v500 = vld [vmem:[%s356 + $0x9c] sm:$0xf]
        %v501 = vld [vmem:[%s356 + $0xa0] sm:$0xf]
        %v502 = vld [vmem:[%s356 + $0xa4] sm:$0x1]
        %v503 = vld [vmem:[%s356 + $0xa8] sm:$0xf]
        %v504 = vld [vmem:[%s356 + $0xac] sm:$0xf]
        %v505 = vld [vmem:[%s356 + $0xb0] sm:$0x1]
        %v506 = vld [vmem:[%s356 + $0xb4] sm:$0xf]
        %v507 = vld [vmem:[%s356 + $0xb8] sm:$0xf]
        %v508 = vld [vmem:[%s356 + $0xbc] sm:$0x1]
        %v541 = vunpack.c.l.b16 %v365
        %v542 = vunpack.c.l.b16 %v366
        %v543 = vunpack.c.l.b16 %v368
        %v544 = vunpack.c.l.b16 %v369
        %v545 = vunpack.c.l.b16 %v371
        %v546 = vunpack.c.l.b16 %v372
        %v547 = vunpack.c.l.b16 %v374
        %v548 = vunpack.c.l.b16 %v375
        %v549 = vunpack.c.l.b16 %v377
        %v550 = vunpack.c.l.b16 %v378
        %v551 = vunpack.c.l.b16 %v380
        %v552 = vunpack.c.l.b16 %v381
        %v553 = vunpack.c.l.b16 %v383
        %v554 = vunpack.c.l.b16 %v384
        %v555 = vunpack.c.l.b16 %v386
        %v556 = vunpack.c.l.b16 %v387
        %v557 = vunpack.c.l.b16 %v389
        %v558 = vunpack.c.l.b16 %v390
        %v559 = vunpack.c.l.b16 %v392
        %v560 = vunpack.c.l.b16 %v393
        %v561 = vunpack.c.l.b16 %v395
        %v562 = vunpack.c.l.b16 %v396
        %v563 = vunpack.c.l.b16 %v398
        %v564 = vunpack.c.l.b16 %v399
        %v565 = vunpack.c.l.b16 %v401
        %v566 = vunpack.c.l.b16 %v402
        %v567 = vunpack.c.l.b16 %v404
        %v568 = vunpack.c.l.b16 %v405
        %v569 = vunpack.c.l.b16 %v407
        %v570 = vunpack.c.l.b16 %v408
        %v571 = vunpack.c.l.b16 %v410
        %v572 = vunpack.c.l.b16 %v411
        %v573 = vpack.c.b16 %v542, %v541
        %v574 = vpack.c.b16 %v544, %v543
        %v575 = vpack.c.b16 %v546, %v545
        %v576 = vpack.c.b16 %v548, %v547
        %v577 = vpack.c.b16 %v550, %v549
        %v578 = vpack.c.b16 %v552, %v551
        %v579 = vpack.c.b16 %v554, %v553
        %v580 = vpack.c.b16 %v556, %v555
        %v581 = vpack.c.b16 %v558, %v557
        %v582 = vpack.c.b16 %v560, %v559
        %v583 = vpack.c.b16 %v562, %v561
        %v584 = vpack.c.b16 %v564, %v563
        %v585 = vpack.c.b16 %v566, %v565
        %v586 = vpack.c.b16 %v568, %v567
        %v587 = vpack.c.b16 %v570, %v569
        %v588 = vpack.c.b16 %v572, %v571
        %v605 = vunpack.c.l.b16 %v367
        %v606 = vunpack.c.l.b16 %v370
        %v607 = vunpack.c.l.b16 %v373
        %v608 = vunpack.c.l.b16 %v376
        %v609 = vunpack.c.l.b16 %v379
        %v610 = vunpack.c.l.b16 %v382
        %v611 = vunpack.c.l.b16 %v385
        %v612 = vunpack.c.l.b16 %v388
        %v613 = vunpack.c.l.b16 %v391
        %v614 = vunpack.c.l.b16 %v394
        %v615 = vunpack.c.l.b16 %v397
        %v616 = vunpack.c.l.b16 %v400
        %v617 = vunpack.c.l.b16 %v403
        %v618 = vunpack.c.l.b16 %v406
        %v619 = vunpack.c.l.b16 %v409
        %v620 = vunpack.c.l.b16 %v412
        %v621 = vpack.c.b16 %v605, %v605
        %v622 = vpack.c.b16 %v606, %v606
        %v623 = vpack.c.b16 %v607, %v607
        %v624 = vpack.c.b16 %v608, %v608
        %v625 = vpack.c.b16 %v609, %v609
        %v626 = vpack.c.b16 %v610, %v610
        %v627 = vpack.c.b16 %v611, %v611
        %v628 = vpack.c.b16 %v612, %v612
        %v629 = vpack.c.b16 %v613, %v613
        %v630 = vpack.c.b16 %v614, %v614
        %v631 = vpack.c.b16 %v615, %v615
        %v632 = vpack.c.b16 %v616, %v616
        %v633 = vpack.c.b16 %v617, %v617
        %v634 = vpack.c.b16 %v618, %v618
        %v635 = vpack.c.b16 %v619, %v619
        %v636 = vpack.c.b16 %v620, %v620
        %vm637 = vsmask.f32 7424
        %v639 = vshrl.u32 %v573, 16
        %v641 = vshll.u32 %v573, 16
        %v643 = vrot.slane %v641, 1
        %v644 = vor.u32 %v639, %v643
        %v646 = vshll.u32 %v621, 16
        %v648 = vrot.slane %v646, 1
        %v649 = vsel %vm637, %v644, %v648
        %v651 = vshrl.u32 %v574, 16
        %v653 = vshll.u32 %v574, 16
        %v655 = vrot.slane %v653, 1
        %v656 = vor.u32 %v651, %v655
        %v658 = vshll.u32 %v622, 16
        %v660 = vrot.slane %v658, 1
        %v661 = vsel %vm637, %v656, %v660
        %v663 = vshrl.u32 %v575, 16
        %v665 = vshll.u32 %v575, 16
        %v667 = vrot.slane %v665, 1
        %v668 = vor.u32 %v663, %v667
        %v670 = vshll.u32 %v623, 16
        %v672 = vrot.slane %v670, 1
        %v673 = vsel %vm637, %v668, %v672
        %v675 = vshrl.u32 %v576, 16
        %v677 = vshll.u32 %v576, 16
        %v679 = vrot.slane %v677, 1
        %v680 = vor.u32 %v675, %v679
        %v682 = vshll.u32 %v624, 16
        %v684 = vrot.slane %v682, 1
        %v685 = vsel %vm637, %v680, %v684
        %v687 = vshrl.u32 %v577, 16
        %v689 = vshll.u32 %v577, 16
        %v691 = vrot.slane %v689, 1
        %v692 = vor.u32 %v687, %v691
        %v694 = vshll.u32 %v625, 16
        %v696 = vrot.slane %v694, 1
        %v697 = vsel %vm637, %v692, %v696
        %v699 = vshrl.u32 %v578, 16
        %v701 = vshll.u32 %v578, 16
        %v703 = vrot.slane %v701, 1
        %v704 = vor.u32 %v699, %v703
        %v706 = vshll.u32 %v626, 16
        %v708 = vrot.slane %v706, 1
        %v709 = vsel %vm637, %v704, %v708
        %v711 = vshrl.u32 %v579, 16
        %v713 = vshll.u32 %v579, 16
        %v715 = vrot.slane %v713, 1
        %v716 = vor.u32 %v711, %v715
        %v718 = vshll.u32 %v627, 16
        %v720 = vrot.slane %v718, 1
        %v721 = vsel %vm637, %v716, %v720
        %v723 = vshrl.u32 %v580, 16
        %v725 = vshll.u32 %v580, 16
        %v727 = vrot.slane %v725, 1
        %v728 = vor.u32 %v723, %v727
        %v730 = vshll.u32 %v628, 16
        %v732 = vrot.slane %v730, 1
        %v733 = vsel %vm637, %v728, %v732
        %v735 = vshrl.u32 %v581, 16
        %v737 = vshll.u32 %v581, 16
        %v739 = vrot.slane %v737, 1
        %v740 = vor.u32 %v735, %v739
        %v742 = vshll.u32 %v629, 16
        %v744 = vrot.slane %v742, 1
        %v745 = vsel %vm637, %v740, %v744
        %v747 = vshrl.u32 %v582, 16
        %v749 = vshll.u32 %v582, 16
        %v751 = vrot.slane %v749, 1
        %v752 = vor.u32 %v747, %v751
        %v754 = vshll.u32 %v630, 16
        %v756 = vrot.slane %v754, 1
        %v757 = vsel %vm637, %v752, %v756
        %v759 = vshrl.u32 %v583, 16
        %v761 = vshll.u32 %v583, 16
        %v763 = vrot.slane %v761, 1
        %v764 = vor.u32 %v759, %v763
        %v766 = vshll.u32 %v631, 16
        %v768 = vrot.slane %v766, 1
        %v769 = vsel %vm637, %v764, %v768
        %v771 = vshrl.u32 %v584, 16
        %v773 = vshll.u32 %v584, 16
        %v775 = vrot.slane %v773, 1
        %v776 = vor.u32 %v771, %v775
        %v778 = vshll.u32 %v632, 16
        %v780 = vrot.slane %v778, 1
        %v781 = vsel %vm637, %v776, %v780
        %v783 = vshrl.u32 %v585, 16
        %v785 = vshll.u32 %v585, 16
        %v787 = vrot.slane %v785, 1
        %v788 = vor.u32 %v783, %v787
        %v790 = vshll.u32 %v633, 16
        %v792 = vrot.slane %v790, 1
        %v793 = vsel %vm637, %v788, %v792
        %v795 = vshrl.u32 %v586, 16
        %v797 = vshll.u32 %v586, 16
        %v799 = vrot.slane %v797, 1
        %v800 = vor.u32 %v795, %v799
        %v802 = vshll.u32 %v634, 16
        %v804 = vrot.slane %v802, 1
        %v805 = vsel %vm637, %v800, %v804
        %v807 = vshrl.u32 %v587, 16
        %v809 = vshll.u32 %v587, 16
        %v811 = vrot.slane %v809, 1
        %v812 = vor.u32 %v807, %v811
        %v814 = vshll.u32 %v635, 16
        %v816 = vrot.slane %v814, 1
        %v817 = vsel %vm637, %v812, %v816
        %v819 = vshrl.u32 %v588, 16
        %v821 = vshll.u32 %v588, 16
        %v823 = vrot.slane %v821, 1
        %v824 = vor.u32 %v819, %v823
        %v826 = vshll.u32 %v636, 16
        %v828 = vrot.slane %v826, 1
        %v829 = vsel %vm637, %v824, %v828
        %830 = vrot.lane.b32.xlu0 %v649, 4
        %v831 = vpop.permute.xlu0 %830
        %832 = vrot.lane.b32.xlu0 %v661, 4
        %v833 = vpop.permute.xlu0 %832
        %834 = vrot.lane.b32.xlu0 %v673, 4
        %v835 = vpop.permute.xlu0 %834
        %836 = vrot.lane.b32.xlu0 %v685, 4
        %v837 = vpop.permute.xlu0 %836
        %838 = vrot.lane.b32.xlu0 %v697, 4
        %v839 = vpop.permute.xlu0 %838
        %840 = vrot.lane.b32.xlu0 %v709, 4
        %v841 = vpop.permute.xlu0 %840
        %842 = vrot.lane.b32.xlu0 %v721, 4
        %v843 = vpop.permute.xlu0 %842
        %844 = vrot.lane.b32.xlu0 %v733, 4
        %v845 = vpop.permute.xlu0 %844
        %846 = vrot.lane.b32.xlu0 %v745, 4
        %v847 = vpop.permute.xlu0 %846
        %848 = vrot.lane.b32.xlu0 %v757, 4
        %v849 = vpop.permute.xlu0 %848
        %850 = vrot.lane.b32.xlu0 %v769, 4
        %v851 = vpop.permute.xlu0 %850
        %852 = vrot.lane.b32.xlu0 %v781, 4
        %v853 = vpop.permute.xlu0 %852
        %854 = vrot.lane.b32.xlu0 %v793, 4
        %v855 = vpop.permute.xlu0 %854
        %856 = vrot.lane.b32.xlu0 %v805, 4
        %v857 = vpop.permute.xlu0 %856
        %858 = vrot.lane.b32.xlu0 %v817, 4
        %v859 = vpop.permute.xlu0 %858
        %860 = vrot.lane.b32.xlu0 %v829, 4
        %v861 = vpop.permute.xlu0 %860
        %vm862 = vcmask 1046528
        %v863 = vrot.slane %v573, 1
        %v864 = vrot.slane %v621, 1
        %v865 = vsel %vm862, %v863, %v864
        %v866 = vrot.slane %v574, 1
        %v867 = vrot.slane %v622, 1
        %v868 = vsel %vm862, %v866, %v867
        %v869 = vrot.slane %v575, 1
        %v870 = vrot.slane %v623, 1
        %v871 = vsel %vm862, %v869, %v870
        %v872 = vrot.slane %v576, 1
        %v873 = vrot.slane %v624, 1
        %v874 = vsel %vm862, %v872, %v873
        %v875 = vrot.slane %v577, 1
        %v876 = vrot.slane %v625, 1
        %v877 = vsel %vm862, %v875, %v876
        %v878 = vrot.slane %v578, 1
        %v879 = vrot.slane %v626, 1
        %v880 = vsel %vm862, %v878, %v879
        %v881 = vrot.slane %v579, 1
        %v882 = vrot.slane %v627, 1
        %v883 = vsel %vm862, %v881, %v882
        %v884 = vrot.slane %v580, 1
        %v885 = vrot.slane %v628, 1
        %v886 = vsel %vm862, %v884, %v885
        %v887 = vrot.slane %v581, 1
        %v888 = vrot.slane %v629, 1
        %v889 = vsel %vm862, %v887, %v888
        %v890 = vrot.slane %v582, 1
        %v891 = vrot.slane %v630, 1
        %v892 = vsel %vm862, %v890, %v891
        %v893 = vrot.slane %v583, 1
        %v894 = vrot.slane %v631, 1
        %v895 = vsel %vm862, %v893, %v894
        %v896 = vrot.slane %v584, 1
        %v897 = vrot.slane %v632, 1
        %v898 = vsel %vm862, %v896, %v897
        %v899 = vrot.slane %v585, 1
        %v900 = vrot.slane %v633, 1
        %v901 = vsel %vm862, %v899, %v900
        %v902 = vrot.slane %v586, 1
        %v903 = vrot.slane %v634, 1
        %v904 = vsel %vm862, %v902, %v903
        %v905 = vrot.slane %v587, 1
        %v906 = vrot.slane %v635, 1
        %v907 = vsel %vm862, %v905, %v906
        %v908 = vrot.slane %v588, 1
        %v909 = vrot.slane %v636, 1
        %v910 = vsel %vm862, %v908, %v909
        %911 = vrot.lane.b32.xlu0 %v865, 8
        %v912 = vpop.permute.xlu0 %911
        %913 = vrot.lane.b32.xlu0 %v868, 8
        %v914 = vpop.permute.xlu0 %913
        %915 = vrot.lane.b32.xlu0 %v871, 8
        %v916 = vpop.permute.xlu0 %915
        %917 = vrot.lane.b32.xlu0 %v874, 8
        %v918 = vpop.permute.xlu0 %917
        %919 = vrot.lane.b32.xlu0 %v877, 8
        %v920 = vpop.permute.xlu0 %919
        %921 = vrot.lane.b32.xlu0 %v880, 8
        %v922 = vpop.permute.xlu0 %921
        %923 = vrot.lane.b32.xlu0 %v883, 8
        %v924 = vpop.permute.xlu0 %923
        %925 = vrot.lane.b32.xlu0 %v886, 8
        %v926 = vpop.permute.xlu0 %925
        %927 = vrot.lane.b32.xlu0 %v889, 8
        %v928 = vpop.permute.xlu0 %927
        %929 = vrot.lane.b32.xlu0 %v892, 8
        %v930 = vpop.permute.xlu0 %929
        %931 = vrot.lane.b32.xlu0 %v895, 8
        %v932 = vpop.permute.xlu0 %931
        %933 = vrot.lane.b32.xlu0 %v898, 8
        %v934 = vpop.permute.xlu0 %933
        %935 = vrot.lane.b32.xlu0 %v901, 8
        %v936 = vpop.permute.xlu0 %935
        %937 = vrot.lane.b32.xlu0 %v904, 8
        %v938 = vpop.permute.xlu0 %937
        %939 = vrot.lane.b32.xlu0 %v907, 8
        %v940 = vpop.permute.xlu0 %939
        %941 = vrot.lane.b32.xlu0 %v910, 8
        %v942 = vpop.permute.xlu0 %941
        %v975 = vunpack.c.l.b16 %v413
        %v976 = vunpack.c.l.b16 %v414
        %v977 = vunpack.c.l.b16 %v416
        %v978 = vunpack.c.l.b16 %v417
        %v979 = vunpack.c.l.b16 %v419
        %v980 = vunpack.c.l.b16 %v420
        %v981 = vunpack.c.l.b16 %v422
        %v982 = vunpack.c.l.b16 %v423
        %v983 = vunpack.c.l.b16 %v425
        %v984 = vunpack.c.l.b16 %v426
        %v985 = vunpack.c.l.b16 %v428
        %v986 = vunpack.c.l.b16 %v429
        %v987 = vunpack.c.l.b16 %v431
        %v988 = vunpack.c.l.b16 %v432
        %v989 = vunpack.c.l.b16 %v434
        %v990 = vunpack.c.l.b16 %v435
        %v991 = vunpack.c.l.b16 %v437
        %v992 = vunpack.c.l.b16 %v438
        %v993 = vunpack.c.l.b16 %v440
        %v994 = vunpack.c.l.b16 %v441
        %v995 = vunpack.c.l.b16 %v443
        %v996 = vunpack.c.l.b16 %v444
        %v997 = vunpack.c.l.b16 %v446
        %v998 = vunpack.c.l.b16 %v447
        %v999 = vunpack.c.l.b16 %v449
        %v1000 = vunpack.c.l.b16 %v450
        %v1001 = vunpack.c.l.b16 %v452
        %v1002 = vunpack.c.l.b16 %v453
        %v1003 = vunpack.c.l.b16 %v455
        %v1004 = vunpack.c.l.b16 %v456
        %v1005 = vunpack.c.l.b16 %v458
        %v1006 = vunpack.c.l.b16 %v459
        %v1007 = vpack.c.b16 %v976, %v975
        %v1008 = vpack.c.b16 %v978, %v977
        %v1009 = vpack.c.b16 %v980, %v979
        %v1010 = vpack.c.b16 %v982, %v981
        %v1011 = vpack.c.b16 %v984, %v983
        %v1012 = vpack.c.b16 %v986, %v985
        %v1013 = vpack.c.b16 %v988, %v987
        %v1014 = vpack.c.b16 %v990, %v989
        %v1015 = vpack.c.b16 %v992, %v991
        %v1016 = vpack.c.b16 %v994, %v993
        %v1017 = vpack.c.b16 %v996, %v995
        %v1018 = vpack.c.b16 %v998, %v997
        %v1019 = vpack.c.b16 %v1000, %v999
        %v1020 = vpack.c.b16 %v1002, %v1001
        %v1021 = vpack.c.b16 %v1004, %v1003
        %v1022 = vpack.c.b16 %v1006, %v1005
        %1023 = vrot.lane.b32.xlu0 %v1007, 12
        %v1024 = vpop.permute.xlu0 %1023
        %1025 = vrot.lane.b32.xlu0 %v1008, 12
        %v1026 = vpop.permute.xlu0 %1025
        %1027 = vrot.lane.b32.xlu0 %v1009, 12
        %v1028 = vpop.permute.xlu0 %1027
        %1029 = vrot.lane.b32.xlu0 %v1010, 12
        %v1030 = vpop.permute.xlu0 %1029
        %1031 = vrot.lane.b32.xlu0 %v1011, 12
        %v1032 = vpop.permute.xlu0 %1031
        %1033 = vrot.lane.b32.xlu0 %v1012, 12
        %v1034 = vpop.permute.xlu0 %1033
        %1035 = vrot.lane.b32.xlu0 %v1013, 12
        %v1036 = vpop.permute.xlu0 %1035
        %1037 = vrot.lane.b32.xlu0 %v1014, 12
        %v1038 = vpop.permute.xlu0 %1037
        %1039 = vrot.lane.b32.xlu0 %v1015, 12
        %v1040 = vpop.permute.xlu0 %1039
        %1041 = vrot.lane.b32.xlu0 %v1016, 12
        %v1042 = vpop.permute.xlu0 %1041
        %1043 = vrot.lane.b32.xlu0 %v1017, 12
        %v1044 = vpop.permute.xlu0 %1043
        %1045 = vrot.lane.b32.xlu0 %v1018, 12
        %v1046 = vpop.permute.xlu0 %1045
        %1047 = vrot.lane.b32.xlu0 %v1019, 12
        %v1048 = vpop.permute.xlu0 %1047
        %1049 = vrot.lane.b32.xlu0 %v1020, 12
        %v1050 = vpop.permute.xlu0 %1049
        %1051 = vrot.lane.b32.xlu0 %v1021, 12
        %v1052 = vpop.permute.xlu0 %1051
        %1053 = vrot.lane.b32.xlu0 %v1022, 12
        %v1054 = vpop.permute.xlu0 %1053
        %v1071 = vunpack.c.l.b16 %v415
        %v1072 = vunpack.c.l.b16 %v418
        %v1073 = vunpack.c.l.b16 %v421
        %v1074 = vunpack.c.l.b16 %v424
        %v1075 = vunpack.c.l.b16 %v427
        %v1076 = vunpack.c.l.b16 %v430
        %v1077 = vunpack.c.l.b16 %v433
        %v1078 = vunpack.c.l.b16 %v436
        %v1079 = vunpack.c.l.b16 %v439
        %v1080 = vunpack.c.l.b16 %v442
        %v1081 = vunpack.c.l.b16 %v445
        %v1082 = vunpack.c.l.b16 %v448
        %v1083 = vunpack.c.l.b16 %v451
        %v1084 = vunpack.c.l.b16 %v454
        %v1085 = vunpack.c.l.b16 %v457
        %v1086 = vunpack.c.l.b16 %v460
        %v1087 = vpack.c.b16 %v1071, %v1071
        %v1088 = vpack.c.b16 %v1072, %v1072
        %v1089 = vpack.c.b16 %v1073, %v1073
        %v1090 = vpack.c.b16 %v1074, %v1074
        %v1091 = vpack.c.b16 %v1075, %v1075
        %v1092 = vpack.c.b16 %v1076, %v1076
        %v1093 = vpack.c.b16 %v1077, %v1077
        %v1094 = vpack.c.b16 %v1078, %v1078
        %v1095 = vpack.c.b16 %v1079, %v1079
        %v1096 = vpack.c.b16 %v1080, %v1080
        %v1097 = vpack.c.b16 %v1081, %v1081
        %v1098 = vpack.c.b16 %v1082, %v1082
        %v1099 = vpack.c.b16 %v1083, %v1083
        %v1100 = vpack.c.b16 %v1084, %v1084
        %v1101 = vpack.c.b16 %v1085, %v1085
        %v1102 = vpack.c.b16 %v1086, %v1086
        %v1104 = vshrl.u32 %v1007, 16
        %v1106 = vshll.u32 %v1007, 16
        %v1108 = vrot.slane %v1106, 1
        %v1109 = vor.u32 %v1104, %v1108
        %v1111 = vshll.u32 %v1087, 16
        %v1113 = vrot.slane %v1111, 1
        %v1114 = vsel %vm637, %v1109, %v1113
        %v1116 = vshrl.u32 %v1008, 16
        %v1118 = vshll.u32 %v1008, 16
        %v1120 = vrot.slane %v1118, 1
        %v1121 = vor.u32 %v1116, %v1120
        %v1123 = vshll.u32 %v1088, 16
        %v1125 = vrot.slane %v1123, 1
        %v1126 = vsel %vm637, %v1121, %v1125
        %v1128 = vshrl.u32 %v1009, 16
        %v1130 = vshll.u32 %v1009, 16
        %v1132 = vrot.slane %v1130, 1
        %v1133 = vor.u32 %v1128, %v1132
        %v1135 = vshll.u32 %v1089, 16
        %v1137 = vrot.slane %v1135, 1
        %v1138 = vsel %vm637, %v1133, %v1137
        %v1140 = vshrl.u32 %v1010, 16
        %v1142 = vshll.u32 %v1010, 16
        %v1144 = vrot.slane %v1142, 1
        %v1145 = vor.u32 %v1140, %v1144
        %v1147 = vshll.u32 %v1090, 16
        %v1149 = vrot.slane %v1147, 1
        %v1150 = vsel %vm637, %v1145, %v1149
        %v1152 = vshrl.u32 %v1011, 16
        %v1154 = vshll.u32 %v1011, 16
        %v1156 = vrot.slane %v1154, 1
        %v1157 = vor.u32 %v1152, %v1156
        %v1159 = vshll.u32 %v1091, 16
        %v1161 = vrot.slane %v1159, 1
        %v1162 = vsel %vm637, %v1157, %v1161
        %v1164 = vshrl.u32 %v1012, 16
        %v1166 = vshll.u32 %v1012, 16
        %v1168 = vrot.slane %v1166, 1
        %v1169 = vor.u32 %v1164, %v1168
        %v1171 = vshll.u32 %v1092, 16
        %v1173 = vrot.slane %v1171, 1
        %v1174 = vsel %vm637, %v1169, %v1173
        %v1176 = vshrl.u32 %v1013, 16
        %v1178 = vshll.u32 %v1013, 16
        %v1180 = vrot.slane %v1178, 1
        %v1181 = vor.u32 %v1176, %v1180
        %v1183 = vshll.u32 %v1093, 16
        %v1185 = vrot.slane %v1183, 1
        %v1186 = vsel %vm637, %v1181, %v1185
        %v1188 = vshrl.u32 %v1014, 16
        %v1190 = vshll.u32 %v1014, 16
        %v1192 = vrot.slane %v1190, 1
        %v1193 = vor.u32 %v1188, %v1192
        %v1195 = vshll.u32 %v1094, 16
        %v1197 = vrot.slane %v1195, 1
        %v1198 = vsel %vm637, %v1193, %v1197
        %v1200 = vshrl.u32 %v1015, 16
        %v1202 = vshll.u32 %v1015, 16
        %v1204 = vrot.slane %v1202, 1
        %v1205 = vor.u32 %v1200, %v1204
        %v1207 = vshll.u32 %v1095, 16
        %v1209 = vrot.slane %v1207, 1
        %v1210 = vsel %vm637, %v1205, %v1209
        %v1212 = vshrl.u32 %v1016, 16
        %v1214 = vshll.u32 %v1016, 16
        %v1216 = vrot.slane %v1214, 1
        %v1217 = vor.u32 %v1212, %v1216
        %v1219 = vshll.u32 %v1096, 16
        %v1221 = vrot.slane %v1219, 1
        %v1222 = vsel %vm637, %v1217, %v1221
        %v1224 = vshrl.u32 %v1017, 16
        %v1226 = vshll.u32 %v1017, 16
        %v1228 = vrot.slane %v1226, 1
        %v1229 = vor.u32 %v1224, %v1228
        %v1231 = vshll.u32 %v1097, 16
        %v1233 = vrot.slane %v1231, 1
        %v1234 = vsel %vm637, %v1229, %v1233
        %v1236 = vshrl.u32 %v1018, 16
        %v1238 = vshll.u32 %v1018, 16
        %v1240 = vrot.slane %v1238, 1
        %v1241 = vor.u32 %v1236, %v1240
        %v1243 = vshll.u32 %v1098, 16
        %v1245 = vrot.slane %v1243, 1
        %v1246 = vsel %vm637, %v1241, %v1245
        %v1248 = vshrl.u32 %v1019, 16
        %v1250 = vshll.u32 %v1019, 16
        %v1252 = vrot.slane %v1250, 1
        %v1253 = vor.u32 %v1248, %v1252
        %v1255 = vshll.u32 %v1099, 16
        %v1257 = vrot.slane %v1255, 1
        %v1258 = vsel %vm637, %v1253, %v1257
        %v1260 = vshrl.u32 %v1020, 16
        %v1262 = vshll.u32 %v1020, 16
        %v1264 = vrot.slane %v1262, 1
        %v1265 = vor.u32 %v1260, %v1264
        %v1267 = vshll.u32 %v1100, 16
        %v1269 = vrot.slane %v1267, 1
        %v1270 = vsel %vm637, %v1265, %v1269
        %v1272 = vshrl.u32 %v1021, 16
        %v1274 = vshll.u32 %v1021, 16
        %v1276 = vrot.slane %v1274, 1
        %v1277 = vor.u32 %v1272, %v1276
        %v1279 = vshll.u32 %v1101, 16
        %v1281 = vrot.slane %v1279, 1
        %v1282 = vsel %vm637, %v1277, %v1281
        %v1284 = vshrl.u32 %v1022, 16
        %v1286 = vshll.u32 %v1022, 16
        %v1288 = vrot.slane %v1286, 1
        %v1289 = vor.u32 %v1284, %v1288
        %v1291 = vshll.u32 %v1102, 16
        %v1293 = vrot.slane %v1291, 1
        %v1294 = vsel %vm637, %v1289, %v1293
        %1295 = vrot.lane.b32.xlu0 %v1114, 16
        %v1296 = vpop.permute.xlu0 %1295
        %1297 = vrot.lane.b32.xlu0 %v1126, 16
        %v1298 = vpop.permute.xlu0 %1297
        %1299 = vrot.lane.b32.xlu0 %v1138, 16
        %v1300 = vpop.permute.xlu0 %1299
        %1301 = vrot.lane.b32.xlu0 %v1150, 16
        %v1302 = vpop.permute.xlu0 %1301
        %1303 = vrot.lane.b32.xlu0 %v1162, 16
        %v1304 = vpop.permute.xlu0 %1303
        %1305 = vrot.lane.b32.xlu0 %v1174, 16
        %v1306 = vpop.permute.xlu0 %1305
        %1307 = vrot.lane.b32.xlu0 %v1186, 16
        %v1308 = vpop.permute.xlu0 %1307
        %1309 = vrot.lane.b32.xlu0 %v1198, 16
        %v1310 = vpop.permute.xlu0 %1309
        %1311 = vrot.lane.b32.xlu0 %v1210, 16
        %v1312 = vpop.permute.xlu0 %1311
        %1313 = vrot.lane.b32.xlu0 %v1222, 16
        %v1314 = vpop.permute.xlu0 %1313
        %1315 = vrot.lane.b32.xlu0 %v1234, 16
        %v1316 = vpop.permute.xlu0 %1315
        %1317 = vrot.lane.b32.xlu0 %v1246, 16
        %v1318 = vpop.permute.xlu0 %1317
        %1319 = vrot.lane.b32.xlu0 %v1258, 16
        %v1320 = vpop.permute.xlu0 %1319
        %1321 = vrot.lane.b32.xlu0 %v1270, 16
        %v1322 = vpop.permute.xlu0 %1321
        %1323 = vrot.lane.b32.xlu0 %v1282, 16
        %v1324 = vpop.permute.xlu0 %1323
        %1325 = vrot.lane.b32.xlu0 %v1294, 16
        %v1326 = vpop.permute.xlu0 %1325
        %v1327 = vrot.slane %v1007, 1
        %v1328 = vrot.slane %v1087, 1
        %v1329 = vsel %vm862, %v1327, %v1328
        %v1330 = vrot.slane %v1008, 1
        %v1331 = vrot.slane %v1088, 1
        %v1332 = vsel %vm862, %v1330, %v1331
        %v1333 = vrot.slane %v1009, 1
        %v1334 = vrot.slane %v1089, 1
        %v1335 = vsel %vm862, %v1333, %v1334
        %v1336 = vrot.slane %v1010, 1
        %v1337 = vrot.slane %v1090, 1
        %v1338 = vsel %vm862, %v1336, %v1337
        %v1339 = vrot.slane %v1011, 1
        %v1340 = vrot.slane %v1091, 1
        %v1341 = vsel %vm862, %v1339, %v1340
        %v1342 = vrot.slane %v1012, 1
        %v1343 = vrot.slane %v1092, 1
        %v1344 = vsel %vm862, %v1342, %v1343
        %v1345 = vrot.slane %v1013, 1
        %v1346 = vrot.slane %v1093, 1
        %v1347 = vsel %vm862, %v1345, %v1346
        %v1348 = vrot.slane %v1014, 1
        %v1349 = vrot.slane %v1094, 1
        %v1350 = vsel %vm862, %v1348, %v1349
        %v1351 = vrot.slane %v1015, 1
        %v1352 = vrot.slane %v1095, 1
        %v1353 = vsel %vm862, %v1351, %v1352
        %v1354 = vrot.slane %v1016, 1
        %v1355 = vrot.slane %v1096, 1
        %v1356 = vsel %vm862, %v1354, %v1355
        %v1357 = vrot.slane %v1017, 1
        %v1358 = vrot.slane %v1097, 1
        %v1359 = vsel %vm862, %v1357, %v1358
        %v1360 = vrot.slane %v1018, 1
        %v1361 = vrot.slane %v1098, 1
        %v1362 = vsel %vm862, %v1360, %v1361
        %v1363 = vrot.slane %v1019, 1
        %v1364 = vrot.slane %v1099, 1
        %v1365 = vsel %vm862, %v1363, %v1364
        %v1366 = vrot.slane %v1020, 1
        %v1367 = vrot.slane %v1100, 1
        %v1368 = vsel %vm862, %v1366, %v1367
        %v1369 = vrot.slane %v1021, 1
        %v1370 = vrot.slane %v1101, 1
        %v1371 = vsel %vm862, %v1369, %v1370
        %v1372 = vrot.slane %v1022, 1
        %v1373 = vrot.slane %v1102, 1
        %v1374 = vsel %vm862, %v1372, %v1373
        %1375 = vrot.lane.b32.xlu0 %v1329, 20
        %v1376 = vpop.permute.xlu0 %1375
        %1377 = vrot.lane.b32.xlu0 %v1332, 20
        %v1378 = vpop.permute.xlu0 %1377
        %1379 = vrot.lane.b32.xlu0 %v1335, 20
        %v1380 = vpop.permute.xlu0 %1379
        %1381 = vrot.lane.b32.xlu0 %v1338, 20
        %v1382 = vpop.permute.xlu0 %1381
        %1383 = vrot.lane.b32.xlu0 %v1341, 20
        %v1384 = vpop.permute.xlu0 %1383
        %1385 = vrot.lane.b32.xlu0 %v1344, 20
        %v1386 = vpop.permute.xlu0 %1385
        %1387 = vrot.lane.b32.xlu0 %v1347, 20
        %v1388 = vpop.permute.xlu0 %1387
        %1389 = vrot.lane.b32.xlu0 %v1350, 20
        %v1390 = vpop.permute.xlu0 %1389
        %1391 = vrot.lane.b32.xlu0 %v1353, 20
        %v1392 = vpop.permute.xlu0 %1391
        %1393 = vrot.lane.b32.xlu0 %v1356, 20
        %v1394 = vpop.permute.xlu0 %1393
        %1395 = vrot.lane.b32.xlu0 %v1359, 20
        %v1396 = vpop.permute.xlu0 %1395
        %1397 = vrot.lane.b32.xlu0 %v1362, 20
        %v1398 = vpop.permute.xlu0 %1397
        %1399 = vrot.lane.b32.xlu0 %v1365, 20
        %v1400 = vpop.permute.xlu0 %1399
        %1401 = vrot.lane.b32.xlu0 %v1368, 20
        %v1402 = vpop.permute.xlu0 %1401
        %1403 = vrot.lane.b32.xlu0 %v1371, 20
        %v1404 = vpop.permute.xlu0 %1403
        %1405 = vrot.lane.b32.xlu0 %v1374, 20
        %v1406 = vpop.permute.xlu0 %1405
        %v1439 = vunpack.c.l.b16 %v461
        %v1440 = vunpack.c.l.b16 %v462
        %v1441 = vunpack.c.l.b16 %v464
        %v1442 = vunpack.c.l.b16 %v465
        %v1443 = vunpack.c.l.b16 %v467
        %v1444 = vunpack.c.l.b16 %v468
        %v1445 = vunpack.c.l.b16 %v470
        %v1446 = vunpack.c.l.b16 %v471
        %v1447 = vunpack.c.l.b16 %v473
        %v1448 = vunpack.c.l.b16 %v474
        %v1449 = vunpack.c.l.b16 %v476
        %v1450 = vunpack.c.l.b16 %v477
        %v1451 = vunpack.c.l.b16 %v479
        %v1452 = vunpack.c.l.b16 %v480
        %v1453 = vunpack.c.l.b16 %v482
        %v1454 = vunpack.c.l.b16 %v483
        %v1455 = vunpack.c.l.b16 %v485
        %v1456 = vunpack.c.l.b16 %v486
        %v1457 = vunpack.c.l.b16 %v488
        %v1458 = vunpack.c.l.b16 %v489
        %v1459 = vunpack.c.l.b16 %v491
        %v1460 = vunpack.c.l.b16 %v492
        %v1461 = vunpack.c.l.b16 %v494
        %v1462 = vunpack.c.l.b16 %v495
        %v1463 = vunpack.c.l.b16 %v497
        %v1464 = vunpack.c.l.b16 %v498
        %v1465 = vunpack.c.l.b16 %v500
        %v1466 = vunpack.c.l.b16 %v501
        %v1467 = vunpack.c.l.b16 %v503
        %v1468 = vunpack.c.l.b16 %v504
        %v1469 = vunpack.c.l.b16 %v506
        %v1470 = vunpack.c.l.b16 %v507
        %v1471 = vpack.c.b16 %v1440, %v1439
        %v1472 = vpack.c.b16 %v1442, %v1441
        %v1473 = vpack.c.b16 %v1444, %v1443
        %v1474 = vpack.c.b16 %v1446, %v1445
        %v1475 = vpack.c.b16 %v1448, %v1447
        %v1476 = vpack.c.b16 %v1450, %v1449
        %v1477 = vpack.c.b16 %v1452, %v1451
        %v1478 = vpack.c.b16 %v1454, %v1453
        %v1479 = vpack.c.b16 %v1456, %v1455
        %v1480 = vpack.c.b16 %v1458, %v1457
        %v1481 = vpack.c.b16 %v1460, %v1459
        %v1482 = vpack.c.b16 %v1462, %v1461
        %v1483 = vpack.c.b16 %v1464, %v1463
        %v1484 = vpack.c.b16 %v1466, %v1465
        %v1485 = vpack.c.b16 %v1468, %v1467
        %v1486 = vpack.c.b16 %v1470, %v1469
        %1487 = vrot.lane.b32.xlu0 %v1471, 24
        %v1488 = vpop.permute.xlu0 %1487
        %1489 = vrot.lane.b32.xlu0 %v1472, 24
        %v1490 = vpop.permute.xlu0 %1489
        %1491 = vrot.lane.b32.xlu0 %v1473, 24
        %v1492 = vpop.permute.xlu0 %1491
        %1493 = vrot.lane.b32.xlu0 %v1474, 24
        %v1494 = vpop.permute.xlu0 %1493
        %1495 = vrot.lane.b32.xlu0 %v1475, 24
        %v1496 = vpop.permute.xlu0 %1495
        %1497 = vrot.lane.b32.xlu0 %v1476, 24
        %v1498 = vpop.permute.xlu0 %1497
        %1499 = vrot.lane.b32.xlu0 %v1477, 24
        %v1500 = vpop.permute.xlu0 %1499
        %1501 = vrot.lane.b32.xlu0 %v1478, 24
        %v1502 = vpop.permute.xlu0 %1501
        %1503 = vrot.lane.b32.xlu0 %v1479, 24
        %v1504 = vpop.permute.xlu0 %1503
        %1505 = vrot.lane.b32.xlu0 %v1480, 24
        %v1506 = vpop.permute.xlu0 %1505
        %1507 = vrot.lane.b32.xlu0 %v1481, 24
        %v1508 = vpop.permute.xlu0 %1507
        %1509 = vrot.lane.b32.xlu0 %v1482, 24
        %v1510 = vpop.permute.xlu0 %1509
        %1511 = vrot.lane.b32.xlu0 %v1483, 24
        %v1512 = vpop.permute.xlu0 %1511
        %1513 = vrot.lane.b32.xlu0 %v1484, 24
        %v1514 = vpop.permute.xlu0 %1513
        %1515 = vrot.lane.b32.xlu0 %v1485, 24
        %v1516 = vpop.permute.xlu0 %1515
        %1517 = vrot.lane.b32.xlu0 %v1486, 24
        %v1518 = vpop.permute.xlu0 %1517
        %v1535 = vunpack.c.l.b16 %v463
        %v1536 = vunpack.c.l.b16 %v466
        %v1537 = vunpack.c.l.b16 %v469
        %v1538 = vunpack.c.l.b16 %v472
        %v1539 = vunpack.c.l.b16 %v475
        %v1540 = vunpack.c.l.b16 %v478
        %v1541 = vunpack.c.l.b16 %v481
        %v1542 = vunpack.c.l.b16 %v484
        %v1543 = vunpack.c.l.b16 %v487
        %v1544 = vunpack.c.l.b16 %v490
        %v1545 = vunpack.c.l.b16 %v493
        %v1546 = vunpack.c.l.b16 %v496
        %v1547 = vunpack.c.l.b16 %v499
        %v1548 = vunpack.c.l.b16 %v502
        %v1549 = vunpack.c.l.b16 %v505
        %v1550 = vunpack.c.l.b16 %v508
        %v1551 = vpack.c.b16 %v1535, %v1535
        %v1552 = vpack.c.b16 %v1536, %v1536
        %v1553 = vpack.c.b16 %v1537, %v1537
        %v1554 = vpack.c.b16 %v1538, %v1538
        %v1555 = vpack.c.b16 %v1539, %v1539
        %v1556 = vpack.c.b16 %v1540, %v1540
        %v1557 = vpack.c.b16 %v1541, %v1541
        %v1558 = vpack.c.b16 %v1542, %v1542
        %v1559 = vpack.c.b16 %v1543, %v1543
        %v1560 = vpack.c.b16 %v1544, %v1544
        %v1561 = vpack.c.b16 %v1545, %v1545
        %v1562 = vpack.c.b16 %v1546, %v1546
        %v1563 = vpack.c.b16 %v1547, %v1547
        %v1564 = vpack.c.b16 %v1548, %v1548
        %v1565 = vpack.c.b16 %v1549, %v1549
        %v1566 = vpack.c.b16 %v1550, %v1550
        %v1568 = vshrl.u32 %v1471, 16
        %v1570 = vshll.u32 %v1471, 16
        %v1572 = vrot.slane %v1570, 1
        %v1573 = vor.u32 %v1568, %v1572
        %v1575 = vshll.u32 %v1551, 16
        %v1577 = vrot.slane %v1575, 1
        %v1578 = vsel %vm637, %v1573, %v1577
        %v1580 = vshrl.u32 %v1472, 16
        %v1582 = vshll.u32 %v1472, 16
        %v1584 = vrot.slane %v1582, 1
        %v1585 = vor.u32 %v1580, %v1584
        %v1587 = vshll.u32 %v1552, 16
        %v1589 = vrot.slane %v1587, 1
        %v1590 = vsel %vm637, %v1585, %v1589
        %v1592 = vshrl.u32 %v1473, 16
        %v1594 = vshll.u32 %v1473, 16
        %v1596 = vrot.slane %v1594, 1
        %v1597 = vor.u32 %v1592, %v1596
        %v1599 = vshll.u32 %v1553, 16
        %v1601 = vrot.slane %v1599, 1
        %v1602 = vsel %vm637, %v1597, %v1601
        %v1604 = vshrl.u32 %v1474, 16
        %v1606 = vshll.u32 %v1474, 16
        %v1608 = vrot.slane %v1606, 1
        %v1609 = vor.u32 %v1604, %v1608
        %v1611 = vshll.u32 %v1554, 16
        %v1613 = vrot.slane %v1611, 1
        %v1614 = vsel %vm637, %v1609, %v1613
        %v1616 = vshrl.u32 %v1475, 16
        %v1618 = vshll.u32 %v1475, 16
        %v1620 = vrot.slane %v1618, 1
        %v1621 = vor.u32 %v1616, %v1620
        %v1623 = vshll.u32 %v1555, 16
        %v1625 = vrot.slane %v1623, 1
        %v1626 = vsel %vm637, %v1621, %v1625
        %v1628 = vshrl.u32 %v1476, 16
        %v1630 = vshll.u32 %v1476, 16
        %v1632 = vrot.slane %v1630, 1
        %v1633 = vor.u32 %v1628, %v1632
        %v1635 = vshll.u32 %v1556, 16
        %v1637 = vrot.slane %v1635, 1
        %v1638 = vsel %vm637, %v1633, %v1637
        %v1640 = vshrl.u32 %v1477, 16
        %v1642 = vshll.u32 %v1477, 16
        %v1644 = vrot.slane %v1642, 1
        %v1645 = vor.u32 %v1640, %v1644
        %v1647 = vshll.u32 %v1557, 16
        %v1649 = vrot.slane %v1647, 1
        %v1650 = vsel %vm637, %v1645, %v1649
        %v1652 = vshrl.u32 %v1478, 16
        %v1654 = vshll.u32 %v1478, 16
        %v1656 = vrot.slane %v1654, 1
        %v1657 = vor.u32 %v1652, %v1656
        %v1659 = vshll.u32 %v1558, 16
        %v1661 = vrot.slane %v1659, 1
        %v1662 = vsel %vm637, %v1657, %v1661
        %v1664 = vshrl.u32 %v1479, 16
        %v1666 = vshll.u32 %v1479, 16
        %v1668 = vrot.slane %v1666, 1
        %v1669 = vor.u32 %v1664, %v1668
        %v1671 = vshll.u32 %v1559, 16
        %v1673 = vrot.slane %v1671, 1
        %v1674 = vsel %vm637, %v1669, %v1673
        %v1676 = vshrl.u32 %v1480, 16
        %v1678 = vshll.u32 %v1480, 16
        %v1680 = vrot.slane %v1678, 1
        %v1681 = vor.u32 %v1676, %v1680
        %v1683 = vshll.u32 %v1560, 16
        %v1685 = vrot.slane %v1683, 1
        %v1686 = vsel %vm637, %v1681, %v1685
        %v1688 = vshrl.u32 %v1481, 16
        %v1690 = vshll.u32 %v1481, 16
        %v1692 = vrot.slane %v1690, 1
        %v1693 = vor.u32 %v1688, %v1692
        %v1695 = vshll.u32 %v1561, 16
        %v1697 = vrot.slane %v1695, 1
        %v1698 = vsel %vm637, %v1693, %v1697
        %v1700 = vshrl.u32 %v1482, 16
        %v1702 = vshll.u32 %v1482, 16
        %v1704 = vrot.slane %v1702, 1
        %v1705 = vor.u32 %v1700, %v1704
        %v1707 = vshll.u32 %v1562, 16
        %v1709 = vrot.slane %v1707, 1
        %v1710 = vsel %vm637, %v1705, %v1709
        %v1712 = vshrl.u32 %v1483, 16
        %v1714 = vshll.u32 %v1483, 16
        %v1716 = vrot.slane %v1714, 1
        %v1717 = vor.u32 %v1712, %v1716
        %v1719 = vshll.u32 %v1563, 16
        %v1721 = vrot.slane %v1719, 1
        %v1722 = vsel %vm637, %v1717, %v1721
        %v1724 = vshrl.u32 %v1484, 16
        %v1726 = vshll.u32 %v1484, 16
        %v1728 = vrot.slane %v1726, 1
        %v1729 = vor.u32 %v1724, %v1728
        %v1731 = vshll.u32 %v1564, 16
        %v1733 = vrot.slane %v1731, 1
        %v1734 = vsel %vm637, %v1729, %v1733
        %v1736 = vshrl.u32 %v1485, 16
        %v1738 = vshll.u32 %v1485, 16
        %v1740 = vrot.slane %v1738, 1
        %v1741 = vor.u32 %v1736, %v1740
        %v1743 = vshll.u32 %v1565, 16
        %v1745 = vrot.slane %v1743, 1
        %v1746 = vsel %vm637, %v1741, %v1745
        %v1748 = vshrl.u32 %v1486, 16
        %v1750 = vshll.u32 %v1486, 16
        %v1752 = vrot.slane %v1750, 1
        %v1753 = vor.u32 %v1748, %v1752
        %v1755 = vshll.u32 %v1566, 16
        %v1757 = vrot.slane %v1755, 1
        %v1758 = vsel %vm637, %v1753, %v1757
        %1759 = vrot.lane.b32.xlu0 %v1578, 28
        %v1760 = vpop.permute.xlu0 %1759
        %1761 = vrot.lane.b32.xlu0 %v1590, 28
        %v1762 = vpop.permute.xlu0 %1761
        %1763 = vrot.lane.b32.xlu0 %v1602, 28
        %v1764 = vpop.permute.xlu0 %1763
        %1765 = vrot.lane.b32.xlu0 %v1614, 28
        %v1766 = vpop.permute.xlu0 %1765
        %1767 = vrot.lane.b32.xlu0 %v1626, 28
        %v1768 = vpop.permute.xlu0 %1767
        %1769 = vrot.lane.b32.xlu0 %v1638, 28
        %v1770 = vpop.permute.xlu0 %1769
        %1771 = vrot.lane.b32.xlu0 %v1650, 28
        %v1772 = vpop.permute.xlu0 %1771
        %1773 = vrot.lane.b32.xlu0 %v1662, 28
        %v1774 = vpop.permute.xlu0 %1773
        %1775 = vrot.lane.b32.xlu0 %v1674, 28
        %v1776 = vpop.permute.xlu0 %1775
        %1777 = vrot.lane.b32.xlu0 %v1686, 28
        %v1778 = vpop.permute.xlu0 %1777
        %1779 = vrot.lane.b32.xlu0 %v1698, 28
        %v1780 = vpop.permute.xlu0 %1779
        %1781 = vrot.lane.b32.xlu0 %v1710, 28
        %v1782 = vpop.permute.xlu0 %1781
        %1783 = vrot.lane.b32.xlu0 %v1722, 28
        %v1784 = vpop.permute.xlu0 %1783
        %1785 = vrot.lane.b32.xlu0 %v1734, 28
        %v1786 = vpop.permute.xlu0 %1785
        %1787 = vrot.lane.b32.xlu0 %v1746, 28
        %v1788 = vpop.permute.xlu0 %1787
        %1789 = vrot.lane.b32.xlu0 %v1758, 28
        %v1790 = vpop.permute.xlu0 %1789
        %v1791 = vrot.slane %v1471, 1
        %v1792 = vrot.slane %v1551, 1
        %v1793 = vsel %vm862, %v1791, %v1792
        %v1794 = vrot.slane %v1472, 1
        %v1795 = vrot.slane %v1552, 1
        %v1796 = vsel %vm862, %v1794, %v1795
        %v1797 = vrot.slane %v1473, 1
        %v1798 = vrot.slane %v1553, 1
        %v1799 = vsel %vm862, %v1797, %v1798
        %v1800 = vrot.slane %v1474, 1
        %v1801 = vrot.slane %v1554, 1
        %v1802 = vsel %vm862, %v1800, %v1801
        %v1803 = vrot.slane %v1475, 1
        %v1804 = vrot.slane %v1555, 1
        %v1805 = vsel %vm862, %v1803, %v1804
        %v1806 = vrot.slane %v1476, 1
        %v1807 = vrot.slane %v1556, 1
        %v1808 = vsel %vm862, %v1806, %v1807
        %v1809 = vrot.slane %v1477, 1
        %v1810 = vrot.slane %v1557, 1
        %v1811 = vsel %vm862, %v1809, %v1810
        %v1812 = vrot.slane %v1478, 1
        %v1813 = vrot.slane %v1558, 1
        %v1814 = vsel %vm862, %v1812, %v1813
        %v1815 = vrot.slane %v1479, 1
        %v1816 = vrot.slane %v1559, 1
        %v1817 = vsel %vm862, %v1815, %v1816
        %v1818 = vrot.slane %v1480, 1
        %v1819 = vrot.slane %v1560, 1
        %v1820 = vsel %vm862, %v1818, %v1819
        %v1821 = vrot.slane %v1481, 1
        %v1822 = vrot.slane %v1561, 1
        %v1823 = vsel %vm862, %v1821, %v1822
        %v1824 = vrot.slane %v1482, 1
        %v1825 = vrot.slane %v1562, 1
        %v1826 = vsel %vm862, %v1824, %v1825
        %v1827 = vrot.slane %v1483, 1
        %v1828 = vrot.slane %v1563, 1
        %v1829 = vsel %vm862, %v1827, %v1828
        %v1830 = vrot.slane %v1484, 1
        %v1831 = vrot.slane %v1564, 1
        %v1832 = vsel %vm862, %v1830, %v1831
        %v1833 = vrot.slane %v1485, 1
        %v1834 = vrot.slane %v1565, 1
        %v1835 = vsel %vm862, %v1833, %v1834
        %v1836 = vrot.slane %v1486, 1
        %v1837 = vrot.slane %v1566, 1
        %v1838 = vsel %vm862, %v1836, %v1837
        %1839 = vrot.lane.b32.xlu0 %v1793, 32
        %v1840 = vpop.permute.xlu0 %1839
        %1841 = vrot.lane.b32.xlu0 %v1796, 32
        %v1842 = vpop.permute.xlu0 %1841
        %1843 = vrot.lane.b32.xlu0 %v1799, 32
        %v1844 = vpop.permute.xlu0 %1843
        %1845 = vrot.lane.b32.xlu0 %v1802, 32
        %v1846 = vpop.permute.xlu0 %1845
        %1847 = vrot.lane.b32.xlu0 %v1805, 32
        %v1848 = vpop.permute.xlu0 %1847
        %1849 = vrot.lane.b32.xlu0 %v1808, 32
        %v1850 = vpop.permute.xlu0 %1849
        %1851 = vrot.lane.b32.xlu0 %v1811, 32
        %v1852 = vpop.permute.xlu0 %1851
        %1853 = vrot.lane.b32.xlu0 %v1814, 32
        %v1854 = vpop.permute.xlu0 %1853
        %1855 = vrot.lane.b32.xlu0 %v1817, 32
        %v1856 = vpop.permute.xlu0 %1855
        %1857 = vrot.lane.b32.xlu0 %v1820, 32
        %v1858 = vpop.permute.xlu0 %1857
        %1859 = vrot.lane.b32.xlu0 %v1823, 32
        %v1860 = vpop.permute.xlu0 %1859
        %1861 = vrot.lane.b32.xlu0 %v1826, 32
        %v1862 = vpop.permute.xlu0 %1861
        %1863 = vrot.lane.b32.xlu0 %v1829, 32
        %v1864 = vpop.permute.xlu0 %1863
        %1865 = vrot.lane.b32.xlu0 %v1832, 32
        %v1866 = vpop.permute.xlu0 %1865
        %1867 = vrot.lane.b32.xlu0 %v1835, 32
        %v1868 = vpop.permute.xlu0 %1867
        %1869 = vrot.lane.b32.xlu0 %v1838, 32
        %v1870 = vpop.permute.xlu0 %1869
        %vm1871 = vcmask 31744
        %v1873 = vsel %vm1871, %v573, %v831
        %v1875 = vsel %vm1871, %v574, %v833
        %v1877 = vsel %vm1871, %v575, %v835
        %v1879 = vsel %vm1871, %v576, %v837
        %v1881 = vsel %vm1871, %v577, %v839
        %v1883 = vsel %vm1871, %v578, %v841
        %v1885 = vsel %vm1871, %v579, %v843
        %v1887 = vsel %vm1871, %v580, %v845
        %v1889 = vsel %vm1871, %v581, %v847
        %v1891 = vsel %vm1871, %v582, %v849
        %v1893 = vsel %vm1871, %v583, %v851
        %v1895 = vsel %vm1871, %v584, %v853
        %v1897 = vsel %vm1871, %v585, %v855
        %v1899 = vsel %vm1871, %v586, %v857
        %v1901 = vsel %vm1871, %v587, %v859
        %v1903 = vsel %vm1871, %v588, %v861
        %vm1904 = vcmask 64512
        %v1906 = vsel %vm1904, %v1873, %v912
        %v1908 = vsel %vm1904, %v1875, %v914
        %v1910 = vsel %vm1904, %v1877, %v916
        %v1912 = vsel %vm1904, %v1879, %v918
        %v1914 = vsel %vm1904, %v1881, %v920
        %v1916 = vsel %vm1904, %v1883, %v922
        %v1918 = vsel %vm1904, %v1885, %v924
        %v1920 = vsel %vm1904, %v1887, %v926
        %v1922 = vsel %vm1904, %v1889, %v928
        %v1924 = vsel %vm1904, %v1891, %v930
        %v1926 = vsel %vm1904, %v1893, %v932
        %v1928 = vsel %vm1904, %v1895, %v934
        %v1930 = vsel %vm1904, %v1897, %v936
        %v1932 = vsel %vm1904, %v1899, %v938
        %v1934 = vsel %vm1904, %v1901, %v940
        %v1936 = vsel %vm1904, %v1903, %v942
        %vm1937 = vcmask 97280
        %v1939 = vsel %vm1937, %v1906, %v1024
        %v1941 = vsel %vm1937, %v1908, %v1026
        %v1943 = vsel %vm1937, %v1910, %v1028
        %v1945 = vsel %vm1937, %v1912, %v1030
        %v1947 = vsel %vm1937, %v1914, %v1032
        %v1949 = vsel %vm1937, %v1916, %v1034
        %v1951 = vsel %vm1937, %v1918, %v1036
        %v1953 = vsel %vm1937, %v1920, %v1038
        %v1955 = vsel %vm1937, %v1922, %v1040
        %v1957 = vsel %vm1937, %v1924, %v1042
        %v1959 = vsel %vm1937, %v1926, %v1044
        %v1961 = vsel %vm1937, %v1928, %v1046
        %v1963 = vsel %vm1937, %v1930, %v1048
        %v1965 = vsel %vm1937, %v1932, %v1050
        %v1967 = vsel %vm1937, %v1934, %v1052
        %v1969 = vsel %vm1937, %v1936, %v1054
        %vm1970 = vcmask 130048
        %v1972 = vsel %vm1970, %v1939, %v1296
        %v1974 = vsel %vm1970, %v1941, %v1298
        %v1976 = vsel %vm1970, %v1943, %v1300
        %v1978 = vsel %vm1970, %v1945, %v1302
        %v1980 = vsel %vm1970, %v1947, %v1304
        %v1982 = vsel %vm1970, %v1949, %v1306
        %v1984 = vsel %vm1970, %v1951, %v1308
        %v1986 = vsel %vm1970, %v1953, %v1310
        %v1988 = vsel %vm1970, %v1955, %v1312
        %v1990 = vsel %vm1970, %v1957, %v1314
        %v1992 = vsel %vm1970, %v1959, %v1316
        %v1994 = vsel %vm1970, %v1961, %v1318
        %v1996 = vsel %vm1970, %v1963, %v1320
        %v1998 = vsel %vm1970, %v1965, %v1322
        %v2000 = vsel %vm1970, %v1967, %v1324
        %v2002 = vsel %vm1970, %v1969, %v1326
        %vm2003 = vcmask 162816
        %v2005 = vsel %vm2003, %v1972, %v1376
        %v2007 = vsel %vm2003, %v1974, %v1378
        %v2009 = vsel %vm2003, %v1976, %v1380
        %v2011 = vsel %vm2003, %v1978, %v1382
        %v2013 = vsel %vm2003, %v1980, %v1384
        %v2015 = vsel %vm2003, %v1982, %v1386
        %v2017 = vsel %vm2003, %v1984, %v1388
        %v2019 = vsel %vm2003, %v1986, %v1390
        %v2021 = vsel %vm2003, %v1988, %v1392
        %v2023 = vsel %vm2003, %v1990, %v1394
        %v2025 = vsel %vm2003, %v1992, %v1396
        %v2027 = vsel %vm2003, %v1994, %v1398
        %v2029 = vsel %vm2003, %v1996, %v1400
        %v2031 = vsel %vm2003, %v1998, %v1402
        %v2033 = vsel %vm2003, %v2000, %v1404
        %v2035 = vsel %vm2003, %v2002, %v1406
        %vm2036 = vcmask 195584
        %v2038 = vsel %vm2036, %v2005, %v1488
        %v2040 = vsel %vm2036, %v2007, %v1490
        %v2042 = vsel %vm2036, %v2009, %v1492
        %v2044 = vsel %vm2036, %v2011, %v1494
        %v2046 = vsel %vm2036, %v2013, %v1496
        %v2048 = vsel %vm2036, %v2015, %v1498
        %v2050 = vsel %vm2036, %v2017, %v1500
        %v2052 = vsel %vm2036, %v2019, %v1502
        %v2054 = vsel %vm2036, %v2021, %v1504
        %v2056 = vsel %vm2036, %v2023, %v1506
        %v2058 = vsel %vm2036, %v2025, %v1508
        %v2060 = vsel %vm2036, %v2027, %v1510
        %v2062 = vsel %vm2036, %v2029, %v1512
        %v2064 = vsel %vm2036, %v2031, %v1514
        %v2066 = vsel %vm2036, %v2033, %v1516
        %v2068 = vsel %vm2036, %v2035, %v1518
        %vm2069 = vcmask 228352
        %v2071 = vsel %vm2069, %v2038, %v1760
        %v2073 = vsel %vm2069, %v2040, %v1762
        %v2075 = vsel %vm2069, %v2042, %v1764
        %v2077 = vsel %vm2069, %v2044, %v1766
        %v2079 = vsel %vm2069, %v2046, %v1768
        %v2081 = vsel %vm2069, %v2048, %v1770
        %v2083 = vsel %vm2069, %v2050, %v1772
        %v2085 = vsel %vm2069, %v2052, %v1774
        %v2087 = vsel %vm2069, %v2054, %v1776
        %v2089 = vsel %vm2069, %v2056, %v1778
        %v2091 = vsel %vm2069, %v2058, %v1780
        %v2093 = vsel %vm2069, %v2060, %v1782
        %v2095 = vsel %vm2069, %v2062, %v1784
        %v2097 = vsel %vm2069, %v2064, %v1786
        %v2099 = vsel %vm2069, %v2066, %v1788
        %v2101 = vsel %vm2069, %v2068, %v1790
        %vm2102 = vcmask 261120
        %v2104 = vsel %vm2102, %v2071, %v1840
        %v2106 = vsel %vm2102, %v2073, %v1842
        %v2108 = vsel %vm2102, %v2075, %v1844
        %v2110 = vsel %vm2102, %v2077, %v1846
        %v2112 = vsel %vm2102, %v2079, %v1848
        %v2114 = vsel %vm2102, %v2081, %v1850
        %v2116 = vsel %vm2102, %v2083, %v1852
        %v2118 = vsel %vm2102, %v2085, %v1854
        %v2120 = vsel %vm2102, %v2087, %v1856
        %v2122 = vsel %vm2102, %v2089, %v1858
        %v2124 = vsel %vm2102, %v2091, %v1860
        %v2126 = vsel %vm2102, %v2093, %v1862
        %v2128 = vsel %vm2102, %v2095, %v1864
        %v2130 = vsel %vm2102, %v2097, %v1866
        %v2132 = vsel %vm2102, %v2099, %v1868
        %v2134 = vsel %vm2102, %v2101, %v1870
        %vm2135 = vcmask 293888
        %v2137 = vsel %vm2135, %v2104, 1065369472
        %v2138 = vsel %vm2135, %v2106, 1065369472
        %v2139 = vsel %vm2135, %v2108, 1065369472
        %v2140 = vsel %vm2135, %v2110, 1065369472
        %v2141 = vsel %vm2135, %v2112, 1065369472
        %v2142 = vsel %vm2135, %v2114, 1065369472
        %v2143 = vsel %vm2135, %v2116, 1065369472
        %v2144 = vsel %vm2135, %v2118, 1065369472
        %v2145 = vsel %vm2135, %v2120, 1065369472
        %v2146 = vsel %vm2135, %v2122, 1065369472
        %v2147 = vsel %vm2135, %v2124, 1065369472
        %v2148 = vsel %vm2135, %v2126, 1065369472
        %v2149 = vsel %vm2135, %v2128, 1065369472
        %v2150 = vsel %vm2135, %v2130, 1065369472
        %v2151 = vsel %vm2135, %v2132, 1065369472
        %v2152 = vsel %vm2135, %v2134, 1065369472
        %v2153 = vld [vmem:[%s3] sm:$0xf]
        %v2154 = vld [vmem:[%s3 + $0x4] sm:$0xf]
        %v2155 = vld [vmem:[%s3 + $0x8] sm:$0xf]
        %v2156 = vld [vmem:[%s3 + $0xc] sm:$0xf]
        %v2157 = vld [vmem:[%s3 + $0x10] sm:$0x7]
        %v2163 = vunpack.c.l.b16 %v2153
        %v2164 = vunpack.c.l.b16 %v2154
        %v2165 = vunpack.c.l.b16 %v2155
        %v2166 = vunpack.c.l.b16 %v2156
        %v2167 = vunpack.c.l.b16 %v2157
        %v2168 = vpack.c.b16 %v2164, %v2163
        %v2169 = vpack.c.b16 %v2166, %v2165
        %v2170 = vpack.c.b16 %v2167, %v2167
        %vm2173 = vcmask 302080
        %v2174 = vsel %vm2173, %v2137, 0
        %v2176 = vsel %vm2173, %v2138, 0
        %v2178 = vsel %vm2173, %v2139, 0
        %v2180 = vsel %vm2173, %v2140, 0
        %v2182 = vsel %vm2173, %v2141, 0
        %v2184 = vsel %vm2173, %v2142, 0
        %v2186 = vsel %vm2173, %v2143, 0
        %v2188 = vsel %vm2173, %v2144, 0
        %v2190 = vsel %vm2173, %v2145, 0
        %v2192 = vsel %vm2173, %v2146, 0
        %v2194 = vsel %vm2173, %v2147, 0
        %v2196 = vsel %vm2173, %v2148, 0
        %v2198 = vsel %vm2173, %v2149, 0
        %v2200 = vsel %vm2173, %v2150, 0
        %v2202 = vsel %vm2173, %v2151, 0
        %v2204 = vsel %vm2173, %v2152, 0
        %vm2206 = vcmask 1041408
        %vm2207 = vcmask 1042432
        %v2208 = vsel %vm2206, 4294967295, 65535
        %v2209 = vsel %vm2207, %v2208, 0
        %v2211 = vand.u32 %v2170, %v2209
        %2213 = vmatprep.subr.bf16.mxu0 0
        %2214 = vmatpush1.bf16.msra.mxu0 0
        %2215 = vmatprep.subr.bf16.mxu0 0
        %2216 = vmatpush1.bf16.msra.mxu0 0
        %2217 = vmatprep.subr.bf16.mxu0 0
        %2218 = vmatpush1.bf16.msra.mxu0 0
        %2219 = vmatprep.subr.bf16.mxu0 0
        %2220 = vmatpush1.bf16.msra.mxu0 0
        %2221 = vmatprep.subr.bf16.mxu0 0
        %2222 = vmatpush1.bf16.msra.mxu0 0
        %2223 = vmatprep.subr.bf16.mxu0 0
        %2224 = vmatpush1.bf16.msra.mxu0 %v2211
        %2225 = vmatprep.subr.bf16.mxu0 0
        %2226 = vmatpush1.bf16.msra.mxu0 %v2169
        %2227 = vmatprep.subr.bf16.mxu0 0
        %2228 = vmatpush1.bf16.msra.mxu0 %v2168
        %2229 = vmatprep.subr.bf16.mxu0 0
        %2230 = vmatpush2.bf16.msra.mxu0 0
        %2231 = vmatprep.subr.bf16.mxu0 0
        %2232 = vmatpush2.bf16.msra.mxu0 0
        %2233 = vmatprep.subr.bf16.mxu0 0
        %2234 = vmatpush2.bf16.msra.mxu0 0
        %2235 = vmatprep.subr.bf16.mxu0 0
        %2236 = vmatpush2.bf16.msra.mxu0 0
        %2237 = vmatprep.subr.bf16.mxu0 0
        %2238 = vmatpush2.bf16.msra.mxu0 0
        %2239 = vmatprep.subr.bf16.mxu0 0
        %2240 = vmatpush2.bf16.msra.mxu0 0
        %2241 = vmatprep.subr.bf16.mxu0 0
        %2242 = vmatpush2.bf16.msra.mxu0 0
        %2243 = vmatprep.subr.bf16.mxu0 0
        %2244 = vmatpush2.bf16.msra.mxu0 0
        %2245 = vmatprep.mubr.bf16.mxu0 0
        %2246 = vmatmul.mubr.bf16.gmra.mxu0 %v2174
        %v2247 = vpop.f32.mrf.mxu0
        %v2248 = vadd.f32 0.0, %v2247
        %v2249 = vpop.f32.mrf.mxu0
        %v2250 = vpop.f32.mrf.mxu0
        %v2251 = vadd.f32 0.0, %v2250
        %v2252 = vpop.f32.mrf.mxu0
        %2253 = vmatprep.mubr.bf16.mxu0 0
        %2254 = vmatmul.mubr.bf16.gmra.mxu0 %v2176
        %v2255 = vpop.f32.mrf.mxu0
        %v2256 = vadd.f32 0.0, %v2255
        %v2257 = vpop.f32.mrf.mxu0
        %v2258 = vpop.f32.mrf.mxu0
        %v2259 = vadd.f32 0.0, %v2258
        %v2260 = vpop.f32.mrf.mxu0
        %2261 = vmatprep.mubr.bf16.mxu0 0
        %2262 = vmatmul.mubr.bf16.gmra.mxu0 %v2178
        %v2263 = vpop.f32.mrf.mxu0
        %v2264 = vadd.f32 0.0, %v2263
        %v2265 = vpop.f32.mrf.mxu0
        %v2266 = vpop.f32.mrf.mxu0
        %v2267 = vadd.f32 0.0, %v2266
        %v2268 = vpop.f32.mrf.mxu0
        %2269 = vmatprep.mubr.bf16.mxu0 0
        %2270 = vmatmul.mubr.bf16.gmra.mxu0 %v2180
        %v2271 = vpop.f32.mrf.mxu0
        %v2272 = vadd.f32 0.0, %v2271
        %v2273 = vpop.f32.mrf.mxu0
        %v2274 = vpop.f32.mrf.mxu0
        %v2275 = vadd.f32 0.0, %v2274
        %v2276 = vpop.f32.mrf.mxu0
        %2277 = vmatprep.mubr.bf16.mxu0 0
        %2278 = vmatmul.mubr.bf16.gmra.mxu0 %v2182
        %v2279 = vpop.f32.mrf.mxu0
        %v2280 = vadd.f32 0.0, %v2279
        %v2281 = vpop.f32.mrf.mxu0
        %v2282 = vpop.f32.mrf.mxu0
        %v2283 = vadd.f32 0.0, %v2282
        %v2284 = vpop.f32.mrf.mxu0
        %2285 = vmatprep.mubr.bf16.mxu0 0
        %2286 = vmatmul.mubr.bf16.gmra.mxu0 %v2184
        %v2287 = vpop.f32.mrf.mxu0
        %v2288 = vadd.f32 0.0, %v2287
        %v2289 = vpop.f32.mrf.mxu0
        %v2290 = vpop.f32.mrf.mxu0
        %v2291 = vadd.f32 0.0, %v2290
        %v2292 = vpop.f32.mrf.mxu0
        %2293 = vmatprep.mubr.bf16.mxu0 0
        %2294 = vmatmul.mubr.bf16.gmra.mxu0 %v2186
        %v2295 = vpop.f32.mrf.mxu0
        %v2296 = vadd.f32 0.0, %v2295
        %v2297 = vpop.f32.mrf.mxu0
        %v2298 = vpop.f32.mrf.mxu0
        %v2299 = vadd.f32 0.0, %v2298
        %v2300 = vpop.f32.mrf.mxu0
        %2301 = vmatprep.mubr.bf16.mxu0 0
        %2302 = vmatmul.mubr.bf16.gmra.mxu0 %v2188
        %v2303 = vpop.f32.mrf.mxu0
        %v2304 = vadd.f32 0.0, %v2303
        %v2305 = vpop.f32.mrf.mxu0
        %v2306 = vpop.f32.mrf.mxu0
        %v2307 = vadd.f32 0.0, %v2306
        %v2308 = vpop.f32.mrf.mxu0
        %2309 = vmatprep.mubr.bf16.mxu0 0
        %2310 = vmatmul.mubr.bf16.gmra.mxu0 %v2190
        %v2311 = vpop.f32.mrf.mxu0
        %v2312 = vadd.f32 0.0, %v2311
        %v2313 = vpop.f32.mrf.mxu0
        %v2314 = vpop.f32.mrf.mxu0
        %v2315 = vadd.f32 0.0, %v2314
        %v2316 = vpop.f32.mrf.mxu0
        %2317 = vmatprep.mubr.bf16.mxu0 0
        %2318 = vmatmul.mubr.bf16.gmra.mxu0 %v2192
        %v2319 = vpop.f32.mrf.mxu0
        %v2320 = vadd.f32 0.0, %v2319
        %v2321 = vpop.f32.mrf.mxu0
        %v2322 = vpop.f32.mrf.mxu0
        %v2323 = vadd.f32 0.0, %v2322
        %v2324 = vpop.f32.mrf.mxu0
        %2325 = vmatprep.mubr.bf16.mxu0 0
        %2326 = vmatmul.mubr.bf16.gmra.mxu0 %v2194
        %v2327 = vpop.f32.mrf.mxu0
        %v2328 = vadd.f32 0.0, %v2327
        %v2329 = vpop.f32.mrf.mxu0
        %v2330 = vpop.f32.mrf.mxu0
        %v2331 = vadd.f32 0.0, %v2330
        %v2332 = vpop.f32.mrf.mxu0
        %2333 = vmatprep.mubr.bf16.mxu0 0
        %2334 = vmatmul.mubr.bf16.gmra.mxu0 %v2196
        %v2335 = vpop.f32.mrf.mxu0
        %v2336 = vadd.f32 0.0, %v2335
        %v2337 = vpop.f32.mrf.mxu0
        %v2338 = vpop.f32.mrf.mxu0
        %v2339 = vadd.f32 0.0, %v2338
        %v2340 = vpop.f32.mrf.mxu0
        %2341 = vmatprep.mubr.bf16.mxu0 0
        %2342 = vmatmul.mubr.bf16.gmra.mxu0 %v2198
        %v2343 = vpop.f32.mrf.mxu0
        %v2344 = vadd.f32 0.0, %v2343
        %v2345 = vpop.f32.mrf.mxu0
        %v2346 = vpop.f32.mrf.mxu0
        %v2347 = vadd.f32 0.0, %v2346
        %v2348 = vpop.f32.mrf.mxu0
        %2349 = vmatprep.mubr.bf16.mxu0 0
        %2350 = vmatmul.mubr.bf16.gmra.mxu0 %v2200
        %v2351 = vpop.f32.mrf.mxu0
        %v2352 = vadd.f32 0.0, %v2351
        %v2353 = vpop.f32.mrf.mxu0
        %v2354 = vpop.f32.mrf.mxu0
        %v2355 = vadd.f32 0.0, %v2354
        %v2356 = vpop.f32.mrf.mxu0
        %2357 = vmatprep.mubr.bf16.mxu0 0
        %2358 = vmatmul.mubr.bf16.gmra.mxu0 %v2202
        %v2359 = vpop.f32.mrf.mxu0
        %v2360 = vadd.f32 0.0, %v2359
        %v2361 = vpop.f32.mrf.mxu0
        %v2362 = vpop.f32.mrf.mxu0
        %v2363 = vadd.f32 0.0, %v2362
        %v2364 = vpop.f32.mrf.mxu0
        %2365 = vmatprep.mubr.bf16.mxu0 0
        %2366 = vmatmul.mubr.bf16.gmra.mxu0 %v2204
        %v2367 = vpop.f32.mrf.mxu0
        %v2368 = vadd.f32 0.0, %v2367
        %v2369 = vpop.f32.mrf.mxu0
        %v2370 = vpop.f32.mrf.mxu0
        %v2371 = vadd.f32 0.0, %v2370
        %v2372 = vpop.f32.mrf.mxu0
        %2373 = vdwg.mxu0
        %v2374 = vmax.f32 %v2248, 0.0
        %v2375 = vmax.f32 %v2251, 0.0
        %v2376 = vmax.f32 %v2256, 0.0
        %v2377 = vmax.f32 %v2259, 0.0
        %v2378 = vmax.f32 %v2264, 0.0
        %v2379 = vmax.f32 %v2267, 0.0
        %v2380 = vmax.f32 %v2272, 0.0
        %v2381 = vmax.f32 %v2275, 0.0
        %v2382 = vmax.f32 %v2280, 0.0
        %v2383 = vmax.f32 %v2283, 0.0
        %v2384 = vmax.f32 %v2288, 0.0
        %v2385 = vmax.f32 %v2291, 0.0
        %v2386 = vmax.f32 %v2296, 0.0
        %v2387 = vmax.f32 %v2299, 0.0
        %v2388 = vmax.f32 %v2304, 0.0
        %v2389 = vmax.f32 %v2307, 0.0
        %v2390 = vmax.f32 %v2312, 0.0
        %v2391 = vmax.f32 %v2315, 0.0
        %v2392 = vmax.f32 %v2320, 0.0
        %v2393 = vmax.f32 %v2323, 0.0
        %v2394 = vmax.f32 %v2328, 0.0
        %v2395 = vmax.f32 %v2331, 0.0
        %v2396 = vmax.f32 %v2336, 0.0
        %v2397 = vmax.f32 %v2339, 0.0
        %v2398 = vmax.f32 %v2344, 0.0
        %v2399 = vmax.f32 %v2347, 0.0
        %v2400 = vmax.f32 %v2352, 0.0
        %v2401 = vmax.f32 %v2355, 0.0
        %v2402 = vmax.f32 %v2360, 0.0
        %v2403 = vmax.f32 %v2363, 0.0
        %v2404 = vmax.f32 %v2368, 0.0
        %v2405 = vmax.f32 %v2371, 0.0
        %v2406 = vld [vmem:[#allocation2] sm:$0x1]
        %v2407 = vadd.f32 %v2374, %v2375
        %v2408 = vadd.f32 %v2407, %v2376
        %v2409 = vadd.f32 %v2408, %v2377
        %v2410 = vadd.f32 %v2409, %v2378
        %v2411 = vadd.f32 %v2410, %v2379
        %v2412 = vadd.f32 %v2411, %v2380
        %v2413 = vadd.f32 %v2412, %v2381
        %v2414 = vadd.f32 %v2413, %v2382
        %v2415 = vadd.f32 %v2414, %v2383
        %v2416 = vadd.f32 %v2415, %v2384
        %v2417 = vadd.f32 %v2416, %v2385
        %v2418 = vadd.f32 %v2417, %v2386
        %v2419 = vadd.f32 %v2418, %v2387
        %v2420 = vadd.f32 %v2419, %v2388
        %v2421 = vadd.f32 %v2420, %v2389
        %v2422 = vadd.f32 %v2421, %v2390
        %v2423 = vadd.f32 %v2422, %v2391
        %v2424 = vadd.f32 %v2423, %v2392
        %v2425 = vadd.f32 %v2424, %v2393
        %v2426 = vadd.f32 %v2425, %v2394
        %v2427 = vadd.f32 %v2426, %v2395
        %v2428 = vadd.f32 %v2427, %v2396
        %v2429 = vadd.f32 %v2428, %v2397
        %v2430 = vadd.f32 %v2429, %v2398
        %v2431 = vadd.f32 %v2430, %v2399
        %v2432 = vadd.f32 %v2431, %v2400
        %v2433 = vadd.f32 %v2432, %v2401
        %v2434 = vadd.f32 %v2433, %v2402
        %v2435 = vadd.f32 %v2434, %v2403
        %v2436 = vadd.f32 %v2435, %v2404
        %v2437 = vadd.f32 %v2436, %v2405
        %v2438 = vrot.slane %v2437, 4
        %v2439 = vadd.f32 %v2437, %v2438
        %v2440 = vrot.slane %v2439, 2
        %v2441 = vadd.f32 %v2439, %v2440
        %v2442 = vrot.slane %v2441, 1
        %v2443 = vadd.f32 %v2441, %v2442
        %v2444 = vadd.f32 %v2406, %v2443
        %2445 = vst [vmem:[#allocation2] sm:$0x1] %v2444
        // Predicated region
        $region49: #{tpu_custom_call.1} parent=43 // pred_check
          %p2446 = pneg %p360
        $region50: #{tpu_custom_call.1} parent=43 // pred_check_branch
          %2448 = sbr.rel (%p2446) target = $region52
        $region51: #{tpu_custom_call.1} parent=43 // pred_region
          %v2449 = vld [vmem:[#allocation2] sm:$0x1]
          %v2450 = vld [vmem:[%s4] sm:$0xff]
          %v2451 = vld [vmem:[%s4 + $0x8] sm:$0xff]
          %v2452 = vld [vmem:[%s4 + $0x10] sm:$0xff]
          %v2453 = vld [vmem:[%s4 + $0x18] sm:$0xff]
          %v2454 = vld [vmem:[%s4 + $0x20] sm:$0xff]
          %v2455 = vld [vmem:[%s4 + $0x28] sm:$0xff]
          %v2456 = vld [vmem:[%s4 + $0x30] sm:$0xff]
          %v2457 = vld [vmem:[%s4 + $0x38] sm:$0xff]
          %v2458 = vld [vmem:[%s4 + $0x40] sm:$0xff]
          %v2459 = vld [vmem:[%s4 + $0x48] sm:$0xff]
          %v2460 = vld [vmem:[%s4 + $0x50] sm:$0xff]
          %v2461 = vld [vmem:[%s4 + $0x58] sm:$0xff]
          %v2462 = vld [vmem:[%s4 + $0x60] sm:$0xff]
          %v2463 = vld [vmem:[%s4 + $0x68] sm:$0xff]
          %v2464 = vld [vmem:[%s4 + $0x70] sm:$0xff]
          %v2465 = vld [vmem:[%s4 + $0x78] sm:$0xff]
          %v2466 = vld [vmem:[%s5] sm:$0x1]
          %2467 = vmatprep.subr.mxu0 0.0
          %2468 = vmatpush1.msra.mxu0 %v2465
          %2469 = vmatprep.subr.mxu0 0.0
          %2470 = vmatpush1.msra.mxu0 %v2464
          %2471 = vmatprep.subr.mxu0 0.0
          %2472 = vmatpush1.msra.mxu0 %v2463
          %2473 = vmatprep.subr.mxu0 0.0
          %2474 = vmatpush1.msra.mxu0 %v2462
          %2475 = vmatprep.subr.mxu0 0.0
          %2476 = vmatpush1.msra.mxu0 %v2461
          %2477 = vmatprep.subr.mxu0 0.0
          %2478 = vmatpush1.msra.mxu0 %v2460
          %2479 = vmatprep.subr.mxu0 0.0
          %2480 = vmatpush1.msra.mxu0 %v2459
          %2481 = vmatprep.subr.mxu0 0.0
          %2482 = vmatpush1.msra.mxu0 %v2458
          %2483 = vmatprep.subr.mxu0 0.0
          %2484 = vmatpush1.msra.mxu0 %v2457
          %2485 = vmatprep.subr.mxu0 0.0
          %2486 = vmatpush1.msra.mxu0 %v2456
          %2487 = vmatprep.subr.mxu0 0.0
          %2488 = vmatpush1.msra.mxu0 %v2455
          %2489 = vmatprep.subr.mxu0 0.0
          %2490 = vmatpush1.msra.mxu0 %v2454
          %2491 = vmatprep.subr.mxu0 0.0
          %2492 = vmatpush1.msra.mxu0 %v2453
          %2493 = vmatprep.subr.mxu0 0.0
          %2494 = vmatpush1.msra.mxu0 %v2452
          %2495 = vmatprep.subr.mxu0 0.0
          %2496 = vmatpush1.msra.mxu0 %v2451
          %2497 = vmatprep.subr.mxu0 0.0
          %2498 = vmatpush1.msra.mxu0 %v2450
          %2499 = vmatprep.subr.mxu0 0.0
          %2500 = vmatpush2.msra.mxu0 0.0
          %2501 = vmatprep.subr.mxu0 0.0
          %2502 = vmatpush2.msra.mxu0 0.0
          %2503 = vmatprep.subr.mxu0 0.0
          %2504 = vmatpush2.msra.mxu0 0.0
          %2505 = vmatprep.subr.mxu0 0.0
          %2506 = vmatpush2.msra.mxu0 0.0
          %2507 = vmatprep.subr.mxu0 0.0
          %2508 = vmatpush2.msra.mxu0 0.0
          %2509 = vmatprep.subr.mxu0 0.0
          %2510 = vmatpush2.msra.mxu0 0.0
          %2511 = vmatprep.subr.mxu0 0.0
          %2512 = vmatpush2.msra.mxu0 0.0
          %2513 = vmatprep.subr.mxu0 0.0
          %2514 = vmatpush2.msra.mxu0 0.0
          %2515 = vmatprep.subr.mxu0 0.0
          %2516 = vmatpush2.msra.mxu0 0.0
          %2517 = vmatprep.subr.mxu0 0.0
          %2518 = vmatpush2.msra.mxu0 0.0
          %2519 = vmatprep.subr.mxu0 0.0
          %2520 = vmatpush2.msra.mxu0 0.0
          %2521 = vmatprep.subr.mxu0 0.0
          %2522 = vmatpush2.msra.mxu0 0.0
          %2523 = vmatprep.subr.mxu0 0.0
          %2524 = vmatpush2.msra.mxu0 0.0
          %2525 = vmatprep.subr.mxu0 0.0
          %2526 = vmatpush2.msra.mxu0 0.0
          %2527 = vmatprep.subr.mxu0 0.0
          %2528 = vmatpush2.msra.mxu0 0.0
          %2529 = vmatprep.subr.mxu0 0.0
          %2530 = vmatpush2.msra.mxu0 0.0
          %2531 = vmatprep.mubr.f32.mxu0 0.0
          %2532 = vmatmul.mubr.f32.gmra.mxu0 %v2449
          %v2533 = vpop.f32.mrf.mxu0
          %v2534 = vadd.f32 %v2466, %v2533
          %v2535 = vpop.f32.mrf.mxu0
          %2536 = vdwg.mxu0
          %2537 = vst [vmem:[%s324] sm:$0x1] %v2534
        $region52: #{tpu_custom_call.1} parent=43 // pred_fallthru
          _
        %s2538 = sand.u32 %s187, 1
        %s2539 = scalar_lea.sflag [#allocation4], %s2538
        %s2540 = sand.u32 %s187, 1
        %s2541 = scalar_lea.vmem [#allocation3], %s2540
        // Predicated region
        $region53: #{tpu_custom_call.1} parent=43 // pred_check
          %p2542 = pneg %p197
        $region54: #{tpu_custom_call.1} parent=43 // pred_check_branch
          %2544 = sbr.rel (%p2542) target = $region56
        $region55: #{tpu_custom_call.1} parent=43 // pred_region
          %s2546 = ssub.s32 16, 16
          %2547 = vsyncadd %s2539, %s2546
          %s2548 = smul.addr %s24, 16
          %s2549 = scalar_lea.hbm %s6, %s2548
          %s2551 = sshll.u32 %s2541, 4
          %s2552 = int_to_ptr.vmem [resolvable:$true] %s2551
          %2554 = dma.vmem_to_hbm [thread:$0]  %s2552, 16, %s2549, %s2539
        $region56: #{tpu_custom_call.1} parent=43 // pred_fallthru
          _
      $region44: #{tpu_custom_call.1} parent=5 // pred_fallthru
        _
      %p2555 = scmp.le.s32.totalorder 2, %s15
      // Predicated region
      $region57: #{tpu_custom_call.1} parent=5 // pred_check
        %p2556 = pneg %p2555
      $region58: #{tpu_custom_call.1} parent=5 // pred_check_branch
        %2558 = sbr.rel (%p2556) target = $region60
      $region59: #{tpu_custom_call.1} parent=5 // pred_region
        %s2559 = ssub.s32 %s15, 2
        // Predicated region
        $region61: #{tpu_custom_call.1} parent=59 // pred_check
          %p2560 = pneg %p203
        $region62: #{tpu_custom_call.1} parent=59 // pred_check_branch
          %2562 = sbr.rel (%p2560) target = $region64
        $region63: #{tpu_custom_call.1} parent=59 // pred_region
          %s2563 = sand.u32 %s188, 1
          %s2564 = scalar_lea.sflag [#allocation4], %s2563
          %s2565 = sand.u32 %s188, 1
          %s2566 = scalar_lea.vmem [#allocation3], %s2565
          %2567 = dma.done %s2564, 16
        $region64: #{tpu_custom_call.1} parent=59 // pred_fallthru
          _
      $region60: #{tpu_custom_call.1} parent=5 // pred_fallthru
        _
    $region6: #{tpu_custom_call.1} parent=1 // loop_footer
      %s19 = sadd.s32 1, %s15
    $region7: #{tpu_custom_call.1} parent=1 // loop_footer_branch
      %14 = sbr.rel target = $region3
    $region8: #{tpu_custom_call.1} parent=1 // loop_exit
      _
    %2568 = vsyncpa [#allocation4], 1
    %s2569 = scalar_lea.sflag [#allocation4], 1
    %2570 = vsyncpa %s2569, 1

</llo_original>
